<compile_context>
chip_gen: v6e
topology: v6e:2x2x1
jax: 0.10.0
libtpu: 0.0.40
codegen_flags: <defaults>
</compile_context>

<pallas_src>
import jax
import jax.numpy as jnp
from jax import lax
from jax.experimental import pallas as pl
from jax.experimental.pallas import tpu as pltpu

EPS = 1e-12  # LayerNorm(eps=1e-12), epsilon inside the sqrt (TF style)


def _onehot_gather(idx_col, table):
    """Row gather via one-hot @ table on the MXU.

    idx_col: (N, 1) int32; table: (V, D) f32  ->  (N, D) f32 (exact gather).
    """
    n = idx_col.shape[0]
    v = table.shape[0]
    onehot = (idx_col == lax.broadcasted_iota(jnp.int32, (n, v), 1)).astype(jnp.float32)
    return jnp.dot(onehot, table,
                   precision=jax.lax.Precision.HIGHEST,
                   preferred_element_type=jnp.float32)


def _layernorm(x, w, b):
    # x: (N, D); w, b: (1, D) -> broadcast over rows.
    u = jnp.mean(x, axis=-1, keepdims=True)
    xc = x - u
    s = jnp.mean(xc * xc, axis=-1, keepdims=True)
    return w * (xc * lax.rsqrt(s + EPS)) + b


def fused_embed_ln_kernel(seq_ref, bseq_ref, btag_ref, posid_ref,
                          item_tab_ref, beh_tab_ref, pos_tab_ref,
                          w_ref, b_ref, out_ref):
    D = item_tab_ref.shape[1]
    w = w_ref[...]                          # (1, D)
    b = b_ref[...]                          # (1, D)

    # In-kernel gathers (MXU): tables are constant-index blocks -> VMEM resident.
    item = _onehot_gather(seq_ref[...], item_tab_ref[...])    # (rows, D)
    pos = _onehot_gather(posid_ref[...], pos_tab_ref[...])    # (rows, D)
    beh = _onehot_gather(bseq_ref[...], beh_tab_ref[...])     # (rows, D)
    tb = _onehot_gather(btag_ref[...], beh_tab_ref[...])      # (rows, D)

    odt = out_ref.dtype

    # bs_emb = LayerNorm(embed_dropout(item_embeddings))
    out_ref[:, 0 * D:1 * D] = _layernorm(item, w, b).astype(odt)
    # global_emb = LayerNorm(embed_dropout(item + pos))
    ip = item + pos
    out_ref[:, 1 * D:2 * D] = _layernorm(ip, w, b).astype(odt)
    # item_embeddings = LayerNorm(embed_dropout(item + pos + behavior + tagbeh))
    bt = beh + tb
    item_ln = _layernorm(ip + bt, w, b)
    out_ref[:, 2 * D:3 * D] = item_ln.astype(odt)
    # i_tb_emb = LayerNorm(embed_dropout(item_embeddings + behavior + tagbeh))
    out_ref[:, 3 * D:4 * D] = _layernorm(item_ln + bt, w, b).astype(odt)


def _pad_rows_to_8(t):
    v = t.shape[0]
    vp = -(-v // 8) * 8
    return jnp.pad(t.astype(jnp.float32), ((0, vp - v), (0, 0)))


def att_diffuse_forward(params, sequence, behavior_sequence, behavior_tag,
                        target_out_block_bytes=2 * 1024 * 1024,
                        out_dtype=jnp.float32):
    """Fused embedding + LayerNorm pipeline of Att_Diffuse_model.forward.

    Returns (packed, mask_seq) where packed has shape (B, L, 4, D) with
      packed[..., 0, :] = bs_emb
      packed[..., 1, :] = global_emb
      packed[..., 2, :] = item_embeddings (post-LN)
      packed[..., 3, :] = i_tb_emb
    Consumers should index the packed tensor directly (it is contiguous);
    no per-result re-slicing is done here.
    """
    B, L = sequence.shape
    D = params["item_emb"].shape[-1]
    mask_seq = (sequence > 0).astype(jnp.float32)                      # (B, L)

    # Tiny embedding tables: pad row counts to a multiple of 8, keep f32.
    item_tab = _pad_rows_to_8(params["item_emb"])                      # (Vi_p, D)
    beh_tab = _pad_rows_to_8(params["beh_emb"])                        # (Vb_p, D)
    pos_tab = _pad_rows_to_8(params["pos_emb"][:L])                    # (Lp,  D)
    ln_w = params["ln_w"].astype(jnp.float32)[None, :]                 # (1, D)
    ln_b = params["ln_b"].astype(jnp.float32)[None, :]                 # (1, D)

    # Batch tile: sized off the OUTPUT block (the dominant HBM traffic), while
    # guaranteeing >= 2 grid steps (v7x megacore + double buffering).
    out_row_bytes = L * 4 * D * jnp.dtype(out_dtype).itemsize
    tb = max(1, int(target_out_block_bytes) // max(1, out_row_bytes))
    tb = min(tb, max(1, -(-B // 2)))
    tb = min(tb, B)
    n_blocks = -(-B // tb)
    Bp = n_blocks * tb

    def flat_idx(a):  # (B, L) int -> (Bp*L, 1) int32 (cheap pad of index rows)
        a = a.astype(jnp.int32)
        if Bp != B:
            a = jnp.pad(a, ((0, Bp - B), (0, 0)))    # pad index 0 -> valid row, discarded
        return a.reshape(Bp * L, 1)

    seq_flat = flat_idx(sequence)
    bseq_flat = flat_idx(behavior_sequence)
    btag_flat = flat_idx(jnp.broadcast_to(behavior_tag.astype(jnp.int32)[:, None], (B, L)))
    posid_flat = flat_idx(jnp.broadcast_to(jnp.arange(L, dtype=jnp.int32)[None, :], (B, L)))

    rows = tb * L
    idx_spec = pl.BlockSpec((rows, 1), lambda i: (i, 0))
    const2 = lambda i: (0, 0)

    grid_spec = pltpu.PrefetchScalarGridSpec(
        num_scalar_prefetch=0,
        grid=(n_blocks,),
        in_specs=[
            idx_spec,                                   # sequence indices
            idx_spec,                                   # behavior_sequence indices
            idx_spec,                                   # behavior_tag (broadcast over L)
            idx_spec,                                   # position ids
            pl.BlockSpec(item_tab.shape, const2),       # item table   (VMEM resident)
            pl.BlockSpec(beh_tab.shape, const2),        # behavior table
            pl.BlockSpec(pos_tab.shape, const2),        # position table
            pl.BlockSpec((1, D), const2),               # LN weight
            pl.BlockSpec((1, D), const2),               # LN bias
        ],
        out_specs=pl.BlockSpec((rows, 4 * D), lambda i: (i, 0)),
    )

    packed = pl.pallas_call(
        fused_embed_ln_kernel,
        out_shape=jax.ShapeDtypeStruct((Bp * L, 4 * D), out_dtype),
        grid_spec=grid_spec,
        compiler_params=pltpu.CompilerParams(
            dimension_semantics=("parallel",),          # shard batch grid across TCs
            vmem_limit_bytes=48 * 1024 * 1024,          # explicit; safe on v5e/v6e/v7x
        ),
    )(seq_flat, bseq_flat, btag_flat, posid_flat,
      item_tab, beh_tab, pos_tab, ln_w, ln_b)

    # Free, contiguous reshape + leading-dim slice: no strided re-reads.
    packed = packed.reshape(Bp, L, 4, D)[:B]
    return packed, mask_seq


def _reference(params, sequence, behavior_sequence, behavior_tag):
    """Pure-JAX reference mirroring the PyTorch semantics (dropout = identity)."""
    def ln(x, w, b):
        u = x.mean(-1, keepdims=True)
        s = ((x - u) ** 2).mean(-1, keepdims=True)
        return w * ((x - u) / jnp.sqrt(s + EPS)) + b

    item = jnp.take(params["item_emb"], sequence, axis=0)
    B, L = sequence.shape
    pos = jnp.take(params["pos_emb"], jnp.arange(L), axis=0)[None]
    beh = jnp.take(params["beh_emb"], behavior_sequence, axis=0)
    tb = jnp.take(params["beh_emb"], behavior_tag, axis=0)[:, None, :]
    w, b = params["ln_w"], params["ln_b"]
    bs_emb = ln(item, w, b)
    glob = ln(item + pos, w, b)
    item_ln = ln(item + pos + beh + tb, w, b)
    itb = ln(item_ln + beh + tb, w, b)
    return bs_emb, glob, item_ln, itb, (sequence > 0).astype(jnp.float32)


if __name__ == "__main__":
    # Small config consistent with the module's __init__:
    #   hidden_size=32, max_seq_length=max_len=8, item_num=20 (+1), behavior_num=3 (+1)
    B, L, D = 2, 8, 32
    item_vocab = 21          # args.item_num + 1
    behavior_vocab = 4       # args.behavior_num + 1 (row 0 = padding_idx)
    init_range = 0.02        # args.initializer_range

    key = jax.random.PRNGKey(0)
    k_item, k_pos, k_beh, k_seq, k_bseq, k_btag = jax.random.split(key, 6)

    params = {
        "item_emb": init_range * jax.random.normal(k_item, (item_vocab, D), jnp.float32),
        "pos_emb": init_range * jax.random.normal(k_pos, (L, D), jnp.float32),
        "beh_emb": (init_range * jax.random.normal(k_beh, (behavior_vocab, D), jnp.float32)
                    ).at[0].set(0.0),  # padding_idx=0
        "ln_w": jnp.ones((D,), jnp.float32),
        "ln_b": jnp.zeros((D,), jnp.float32),
    }

    sequence = jax.random.randint(k_seq, (B, L), 1, item_vocab, dtype=jnp.int32)
    sequence = sequence.at[0, 0].set(0)  # include a padded position
    behavior_sequence = jax.random.randint(k_bseq, (B, L), 1, behavior_vocab, dtype=jnp.int32)
    behavior_tag = jax.random.randint(k_btag, (B,), 1, behavior_vocab, dtype=jnp.int32)

    packed, mask_seq = att_diffuse_forward(params, sequence, behavior_sequence, behavior_tag)
    packed, mask_seq = jax.block_until_ready((packed, mask_seq))

    refs = _reference(params, sequence, behavior_sequence, behavior_tag)
    outs = (packed[:, :, 0, :], packed[:, :, 1, :], packed[:, :, 2, :], packed[:, :, 3, :],
            mask_seq)
    for o, r in zip(outs, refs):
        assert jnp.allclose(o, r, atol=1e-5, rtol=1e-5), "mismatch vs reference"

    print("KERNEL_OK")
</pallas_src>

<mosaic_0001>
module attributes {stable_mosaic.version = 11 : i64} {
  func.func @fused_embed_ln_kernel(%arg0: i32, %arg1: memref<8x1xi32, #tpu.memory_space<vmem>>, %arg2: memref<8x1xi32, #tpu.memory_space<vmem>>, %arg3: memref<8x1xi32, #tpu.memory_space<vmem>>, %arg4: memref<8x1xi32, #tpu.memory_space<vmem>>, %arg5: memref<24x32xf32, #tpu.memory_space<vmem>>, %arg6: memref<8x32xf32, #tpu.memory_space<vmem>>, %arg7: memref<8x32xf32, #tpu.memory_space<vmem>>, %arg8: memref<1x32xf32, #tpu.memory_space<vmem>>, %arg9: memref<1x32xf32, #tpu.memory_space<vmem>>, %arg10: memref<8x128xf32, #tpu.memory_space<vmem>>) attributes {dimension_semantics = [#tpu.dimension_semantics<parallel>], iteration_bounds = array<i64: 2>, scalar_prefetch = 0 : i64, scratch_operands = 0 : i64, tpu.core_type = #tpu.core_type<tc>, window_params = [{transform_indices = @transform_0, window_bounds = array<i64: 8, 1>}, {transform_indices = @transform_1, window_bounds = array<i64: 8, 1>}, {transform_indices = @transform_2, window_bounds = array<i64: 8, 1>}, {transform_indices = @transform_3, window_bounds = array<i64: 8, 1>}, {pipeline_mode = #tpu.pipeline_mode<synchronous>, transform_indices = @transform_4, window_bounds = array<i64: 24, 32>}, {pipeline_mode = #tpu.pipeline_mode<synchronous>, transform_indices = @transform_5, window_bounds = array<i64: 8, 32>}, {pipeline_mode = #tpu.pipeline_mode<synchronous>, transform_indices = @transform_6, window_bounds = array<i64: 8, 32>}, {pipeline_mode = #tpu.pipeline_mode<synchronous>, transform_indices = @transform_7, window_bounds = array<i64: 1, 32>}, {pipeline_mode = #tpu.pipeline_mode<synchronous>, transform_indices = @transform_8, window_bounds = array<i64: 1, 32>}, {transform_indices = @transform_9, window_bounds = array<i64: 8, 128>}]} {
    %c0 = arith.constant 0 : index
    %c0_0 = arith.constant 0 : index
    %0 = vector.load %arg8[%c0, %c0_0] : memref<1x32xf32, #tpu.memory_space<vmem>>, vector<1x32xf32>
    %c0_1 = arith.constant 0 : index
    %c0_2 = arith.constant 0 : index
    %1 = vector.load %arg9[%c0_1, %c0_2] : memref<1x32xf32, #tpu.memory_space<vmem>>, vector<1x32xf32>
    %c0_3 = arith.constant 0 : index
    %c0_4 = arith.constant 0 : index
    %2 = vector.load %arg1[%c0_3, %c0_4] : memref<8x1xi32, #tpu.memory_space<vmem>>, vector<8x1xi32>
    %c0_5 = arith.constant 0 : index
    %c0_6 = arith.constant 0 : index
    %3 = vector.load %arg5[%c0_5, %c0_6] : memref<24x32xf32, #tpu.memory_space<vmem>>, vector<24x32xf32>
    %4 = tpu.iota {dimensions = array<i32: 1>} : vector<8x24xi32>
    %5 = vector.broadcast %2 : vector<8x1xi32> to vector<8x24xi32>
    %6 = arith.cmpi eq, %5, %4 : vector<8x24xi32>
    %7 = arith.extui %6 : vector<8x24xi1> to vector<8x24xi32>
    %8 = arith.sitofp %7 : vector<8x24xi32> to vector<8x24xf32>
    %cst = arith.constant dense<0.000000e+00> : vector<8x32xf32>
    %9 = tpu.matmul %8, %3, %cst {dimension_numbers = #tpu.dot_dimension_numbers<[1], [0], [0], [1], [0, 0, 1, 1], [], []>, precision = #tpu.contract_precision<fp32>} : vector<8x24xf32>, vector<24x32xf32>, vector<8x32xf32> -> vector<8x32xf32>
    %c0_7 = arith.constant 0 : index
    %c0_8 = arith.constant 0 : index
    %10 = vector.load %arg4[%c0_7, %c0_8] : memref<8x1xi32, #tpu.memory_space<vmem>>, vector<8x1xi32>
    %c0_9 = arith.constant 0 : index
    %c0_10 = arith.constant 0 : index
    %11 = vector.load %arg7[%c0_9, %c0_10] : memref<8x32xf32, #tpu.memory_space<vmem>>, vector<8x32xf32>
    %12 = tpu.iota {dimensions = array<i32: 1>} : vector<8x8xi32>
    %13 = vector.broadcast %10 : vector<8x1xi32> to vector<8x8xi32>
    %14 = arith.cmpi eq, %13, %12 : vector<8x8xi32>
    %15 = arith.extui %14 : vector<8x8xi1> to vector<8x8xi32>
    %16 = arith.sitofp %15 : vector<8x8xi32> to vector<8x8xf32>
    %cst_11 = arith.constant dense<0.000000e+00> : vector<8x32xf32>
    %17 = tpu.matmul %16, %11, %cst_11 {dimension_numbers = #tpu.dot_dimension_numbers<[1], [0], [0], [1], [0, 0, 1, 1], [], []>, precision = #tpu.contract_precision<fp32>} : vector<8x8xf32>, vector<8x32xf32>, vector<8x32xf32> -> vector<8x32xf32>
    %c0_12 = arith.constant 0 : index
    %c0_13 = arith.constant 0 : index
    %18 = vector.load %arg2[%c0_12, %c0_13] : memref<8x1xi32, #tpu.memory_space<vmem>>, vector<8x1xi32>
    %c0_14 = arith.constant 0 : index
    %c0_15 = arith.constant 0 : index
    %19 = vector.load %arg6[%c0_14, %c0_15] : memref<8x32xf32, #tpu.memory_space<vmem>>, vector<8x32xf32>
    %20 = tpu.iota {dimensions = array<i32: 1>} : vector<8x8xi32>
    %21 = vector.broadcast %18 : vector<8x1xi32> to vector<8x8xi32>
    %22 = arith.cmpi eq, %21, %20 : vector<8x8xi32>
    %23 = arith.extui %22 : vector<8x8xi1> to vector<8x8xi32>
    %24 = arith.sitofp %23 : vector<8x8xi32> to vector<8x8xf32>
    %cst_16 = arith.constant dense<0.000000e+00> : vector<8x32xf32>
    %25 = tpu.matmul %24, %19, %cst_16 {dimension_numbers = #tpu.dot_dimension_numbers<[1], [0], [0], [1], [0, 0, 1, 1], [], []>, precision = #tpu.contract_precision<fp32>} : vector<8x8xf32>, vector<8x32xf32>, vector<8x32xf32> -> vector<8x32xf32>
    %c0_17 = arith.constant 0 : index
    %c0_18 = arith.constant 0 : index
    %26 = vector.load %arg3[%c0_17, %c0_18] : memref<8x1xi32, #tpu.memory_space<vmem>>, vector<8x1xi32>
    %c0_19 = arith.constant 0 : index
    %c0_20 = arith.constant 0 : index
    %27 = vector.load %arg6[%c0_19, %c0_20] : memref<8x32xf32, #tpu.memory_space<vmem>>, vector<8x32xf32>
    %28 = tpu.iota {dimensions = array<i32: 1>} : vector<8x8xi32>
    %29 = vector.broadcast %26 : vector<8x1xi32> to vector<8x8xi32>
    %30 = arith.cmpi eq, %29, %28 : vector<8x8xi32>
    %31 = arith.extui %30 : vector<8x8xi1> to vector<8x8xi32>
    %32 = arith.sitofp %31 : vector<8x8xi32> to vector<8x8xf32>
    %cst_21 = arith.constant dense<0.000000e+00> : vector<8x32xf32>
    %33 = tpu.matmul %32, %27, %cst_21 {dimension_numbers = #tpu.dot_dimension_numbers<[1], [0], [0], [1], [0, 0, 1, 1], [], []>, precision = #tpu.contract_precision<fp32>} : vector<8x8xf32>, vector<8x32xf32>, vector<8x32xf32> -> vector<8x32xf32>
    %cst_22 = arith.constant dense<0.000000e+00> : vector<8xf32>
    %34 = vector.multi_reduction <add>, %9, %cst_22 [1] : vector<8x32xf32> to vector<8xf32>
    %35 = vector.shape_cast %34 : vector<8xf32> to vector<8x1xf32>
    %cst_23 = arith.constant 3.200000e+01 : f32
    %36 = vector.broadcast %cst_23 : f32 to vector<8x1xf32>
    %37 = arith.divf %35, %36 : vector<8x1xf32>
    %38 = vector.broadcast %37 : vector<8x1xf32> to vector<8x32xf32>
    %39 = arith.subf %9, %38 : vector<8x32xf32>
    %40 = arith.mulf %39, %39 : vector<8x32xf32>
    %cst_24 = arith.constant dense<0.000000e+00> : vector<8xf32>
    %41 = vector.multi_reduction <add>, %40, %cst_24 [1] : vector<8x32xf32> to vector<8xf32>
    %42 = vector.shape_cast %41 : vector<8xf32> to vector<8x1xf32>
    %cst_25 = arith.constant 3.200000e+01 : f32
    %43 = vector.broadcast %cst_25 : f32 to vector<8x1xf32>
    %44 = arith.divf %42, %43 : vector<8x1xf32>
    %cst_26 = arith.constant 9.99999996E-13 : f32
    %45 = vector.broadcast %cst_26 : f32 to vector<8x1xf32>
    %46 = arith.addf %44, %45 : vector<8x1xf32>
    %47 = math.rsqrt %46 : vector<8x1xf32>
    %48 = vector.broadcast %47 : vector<8x1xf32> to vector<8x32xf32>
    %49 = arith.mulf %39, %48 : vector<8x32xf32>
    %50 = vector.broadcast %0 : vector<1x32xf32> to vector<8x32xf32>
    %51 = arith.mulf %50, %49 : vector<8x32xf32>
    %52 = vector.broadcast %1 : vector<1x32xf32> to vector<8x32xf32>
    %53 = arith.addf %51, %52 : vector<8x32xf32>
    %c0_27 = arith.constant 0 : index
    %c0_28 = arith.constant 0 : index
    %54 = vector.load %arg10[%c0_27, %c0_28] : memref<8x128xf32, #tpu.memory_space<vmem>>, vector<8x32xf32>
    tpu.vector_store %arg10[%c0_27, %c0_28], %53 {strides = array<i32>} : memref<8x128xf32, #tpu.memory_space<vmem>>, vector<8x32xf32>,
    %55 = arith.addf %9, %17 : vector<8x32xf32>
    %cst_29 = arith.constant dense<0.000000e+00> : vector<8xf32>
    %56 = vector.multi_reduction <add>, %55, %cst_29 [1] : vector<8x32xf32> to vector<8xf32>
    %57 = vector.shape_cast %56 : vector<8xf32> to vector<8x1xf32>
    %cst_30 = arith.constant 3.200000e+01 : f32
    %58 = vector.broadcast %cst_30 : f32 to vector<8x1xf32>
    %59 = arith.divf %57, %58 : vector<8x1xf32>
    %60 = vector.broadcast %59 : vector<8x1xf32> to vector<8x32xf32>
    %61 = arith.subf %55, %60 : vector<8x32xf32>
    %62 = arith.mulf %61, %61 : vector<8x32xf32>
    %cst_31 = arith.constant dense<0.000000e+00> : vector<8xf32>
    %63 = vector.multi_reduction <add>, %62, %cst_31 [1] : vector<8x32xf32> to vector<8xf32>
    %64 = vector.shape_cast %63 : vector<8xf32> to vector<8x1xf32>
    %cst_32 = arith.constant 3.200000e+01 : f32
    %65 = vector.broadcast %cst_32 : f32 to vector<8x1xf32>
    %66 = arith.divf %64, %65 : vector<8x1xf32>
    %cst_33 = arith.constant 9.99999996E-13 : f32
    %67 = vector.broadcast %cst_33 : f32 to vector<8x1xf32>
    %68 = arith.addf %66, %67 : vector<8x1xf32>
    %69 = math.rsqrt %68 : vector<8x1xf32>
    %70 = vector.broadcast %69 : vector<8x1xf32> to vector<8x32xf32>
    %71 = arith.mulf %61, %70 : vector<8x32xf32>
    %72 = vector.broadcast %0 : vector<1x32xf32> to vector<8x32xf32>
    %73 = arith.mulf %72, %71 : vector<8x32xf32>
    %74 = vector.broadcast %1 : vector<1x32xf32> to vector<8x32xf32>
    %75 = arith.addf %73, %74 : vector<8x32xf32>
    %c0_34 = arith.constant 0 : index
    %c32 = arith.constant 32 : index
    %76 = vector.load %arg10[%c0_34, %c32] : memref<8x128xf32, #tpu.memory_space<vmem>>, vector<8x32xf32>
    tpu.vector_store %arg10[%c0_34, %c32], %75 {strides = array<i32>} : memref<8x128xf32, #tpu.memory_space<vmem>>, vector<8x32xf32>,
    %77 = arith.addf %25, %33 : vector<8x32xf32>
    %78 = arith.addf %55, %77 : vector<8x32xf32>
    %cst_35 = arith.constant dense<0.000000e+00> : vector<8xf32>
    %79 = vector.multi_reduction <add>, %78, %cst_35 [1] : vector<8x32xf32> to vector<8xf32>
    %80 = vector.shape_cast %79 : vector<8xf32> to vector<8x1xf32>
    %cst_36 = arith.constant 3.200000e+01 : f32
    %81 = vector.broadcast %cst_36 : f32 to vector<8x1xf32>
    %82 = arith.divf %80, %81 : vector<8x1xf32>
    %83 = vector.broadcast %82 : vector<8x1xf32> to vector<8x32xf32>
    %84 = arith.subf %78, %83 : vector<8x32xf32>
    %85 = arith.mulf %84, %84 : vector<8x32xf32>
    %cst_37 = arith.constant dense<0.000000e+00> : vector<8xf32>
    %86 = vector.multi_reduction <add>, %85, %cst_37 [1] : vector<8x32xf32> to vector<8xf32>
    %87 = vector.shape_cast %86 : vector<8xf32> to vector<8x1xf32>
    %cst_38 = arith.constant 3.200000e+01 : f32
    %88 = vector.broadcast %cst_38 : f32 to vector<8x1xf32>
    %89 = arith.divf %87, %88 : vector<8x1xf32>
    %cst_39 = arith.constant 9.99999996E-13 : f32
    %90 = vector.broadcast %cst_39 : f32 to vector<8x1xf32>
    %91 = arith.addf %89, %90 : vector<8x1xf32>
    %92 = math.rsqrt %91 : vector<8x1xf32>
    %93 = vector.broadcast %92 : vector<8x1xf32> to vector<8x32xf32>
    %94 = arith.mulf %84, %93 : vector<8x32xf32>
    %95 = vector.broadcast %0 : vector<1x32xf32> to vector<8x32xf32>
    %96 = arith.mulf %95, %94 : vector<8x32xf32>
    %97 = vector.broadcast %1 : vector<1x32xf32> to vector<8x32xf32>
    %98 = arith.addf %96, %97 : vector<8x32xf32>
    %c0_40 = arith.constant 0 : index
    %c64 = arith.constant 64 : index
    %99 = vector.load %arg10[%c0_40, %c64] : memref<8x128xf32, #tpu.memory_space<vmem>>, vector<8x32xf32>
    tpu.vector_store %arg10[%c0_40, %c64], %98 {strides = array<i32>} : memref<8x128xf32, #tpu.memory_space<vmem>>, vector<8x32xf32>,
    %100 = arith.addf %98, %77 : vector<8x32xf32>
    %cst_41 = arith.constant dense<0.000000e+00> : vector<8xf32>
    %101 = vector.multi_reduction <add>, %100, %cst_41 [1] : vector<8x32xf32> to vector<8xf32>
    %102 = vector.shape_cast %101 : vector<8xf32> to vector<8x1xf32>
    %cst_42 = arith.constant 3.200000e+01 : f32
    %103 = vector.broadcast %cst_42 : f32 to vector<8x1xf32>
    %104 = arith.divf %102, %103 : vector<8x1xf32>
    %105 = vector.broadcast %104 : vector<8x1xf32> to vector<8x32xf32>
    %106 = arith.subf %100, %105 : vector<8x32xf32>
    %107 = arith.mulf %106, %106 : vector<8x32xf32>
    %cst_43 = arith.constant dense<0.000000e+00> : vector<8xf32>
    %108 = vector.multi_reduction <add>, %107, %cst_43 [1] : vector<8x32xf32> to vector<8xf32>
    %109 = vector.shape_cast %108 : vector<8xf32> to vector<8x1xf32>
    %cst_44 = arith.constant 3.200000e+01 : f32
    %110 = vector.broadcast %cst_44 : f32 to vector<8x1xf32>
    %111 = arith.divf %109, %110 : vector<8x1xf32>
    %cst_45 = arith.constant 9.99999996E-13 : f32
    %112 = vector.broadcast %cst_45 : f32 to vector<8x1xf32>
    %113 = arith.addf %111, %112 : vector<8x1xf32>
    %114 = math.rsqrt %113 : vector<8x1xf32>
    %115 = vector.broadcast %114 : vector<8x1xf32> to vector<8x32xf32>
    %116 = arith.mulf %106, %115 : vector<8x32xf32>
    %117 = vector.broadcast %0 : vector<1x32xf32> to vector<8x32xf32>
    %118 = arith.mulf %117, %116 : vector<8x32xf32>
    %119 = vector.broadcast %1 : vector<1x32xf32> to vector<8x32xf32>
    %120 = arith.addf %118, %119 : vector<8x32xf32>
    %c0_46 = arith.constant 0 : index
    %c96 = arith.constant 96 : index
    %121 = vector.load %arg10[%c0_46, %c96] : memref<8x128xf32, #tpu.memory_space<vmem>>, vector<8x32xf32>
    tpu.vector_store %arg10[%c0_46, %c96], %120 {strides = array<i32>} : memref<8x128xf32, #tpu.memory_space<vmem>>, vector<8x32xf32>,
    return
  }
  func.func @transform_0(%arg0: i32) -> (i32, i32) {
    %c0_i32 = arith.constant 0 : i32
    %c0_i32_0 = arith.constant 0 : i32
    return %arg0, %c0_i32 : i32, i32
  }
  func.func @transform_1(%arg0: i32) -> (i32, i32) {
    %c0_i32 = arith.constant 0 : i32
    %c0_i32_0 = arith.constant 0 : i32
    return %arg0, %c0_i32 : i32, i32
  }
  func.func @transform_2(%arg0: i32) -> (i32, i32) {
    %c0_i32 = arith.constant 0 : i32
    %c0_i32_0 = arith.constant 0 : i32
    return %arg0, %c0_i32 : i32, i32
  }
  func.func @transform_3(%arg0: i32) -> (i32, i32) {
    %c0_i32 = arith.constant 0 : i32
    %c0_i32_0 = arith.constant 0 : i32
    return %arg0, %c0_i32 : i32, i32
  }
  func.func @transform_4(%arg0: i32) -> (i32, i32) {
    %c0_i32 = arith.constant 0 : i32
    %c0_i32_0 = arith.constant 0 : i32
    %c0_i32_1 = arith.constant 0 : i32
    return %c0_i32, %c0_i32_0 : i32, i32
  }
  func.func @transform_5(%arg0: i32) -> (i32, i32) {
    %c0_i32 = arith.constant 0 : i32
    %c0_i32_0 = arith.constant 0 : i32
    %c0_i32_1 = arith.constant 0 : i32
    return %c0_i32, %c0_i32_0 : i32, i32
  }
  func.func @transform_6(%arg0: i32) -> (i32, i32) {
    %c0_i32 = arith.constant 0 : i32
    %c0_i32_0 = arith.constant 0 : i32
    %c0_i32_1 = arith.constant 0 : i32
    return %c0_i32, %c0_i32_0 : i32, i32
  }
  func.func @transform_7(%arg0: i32) -> (i32, i32) {
    %c0_i32 = arith.constant 0 : i32
    %c0_i32_0 = arith.constant 0 : i32
    %c0_i32_1 = arith.constant 0 : i32
    return %c0_i32, %c0_i32_0 : i32, i32
  }
  func.func @transform_8(%arg0: i32) -> (i32, i32) {
    %c0_i32 = arith.constant 0 : i32
    %c0_i32_0 = arith.constant 0 : i32
    %c0_i32_1 = arith.constant 0 : i32
    return %c0_i32, %c0_i32_0 : i32, i32
  }
  func.func @transform_9(%arg0: i32) -> (i32, i32) {
    %c0_i32 = arith.constant 0 : i32
    %c0_i32_0 = arith.constant 0 : i32
    return %arg0, %c0_i32 : i32, i32
  }
}

</mosaic_0001>

<llo_original>
// kernel: tpu_custom_call.1
$region0: #{tpu_custom_call.1}
  #allocation0 [shape = 'u32[]', space=smem, size = 0x4, offset = 0x4, fixed_abs, tag = 'smem constant byte address 0x4 - core index']
  #allocation1 [shape = 'u32[144,128]{1,0:T(1,128)}', space=vmem, size = 0x12000, scoped, tag = 'internal scratch']
  %s0 = inlined_call_operand.vmem [shape: s32[16,1], index: 0, kind: input, shape index: {}]
  %s1 = inlined_call_operand.vmem [shape: s32[16,1], index: 1, kind: input, shape index: {}]
  %s2 = inlined_call_operand.vmem [shape: s32[16,1], index: 2, kind: input, shape index: {}]
  %s3 = inlined_call_operand.vmem [shape: s32[16,1], index: 3, kind: input, shape index: {}]
  %s4 = inlined_call_operand.vmem [shape: f32[24,32], index: 4, kind: input, shape index: {}]
  %s5 = inlined_call_operand.vmem [shape: f32[8,32], index: 5, kind: input, shape index: {}]
  %s6 = inlined_call_operand.vmem [shape: f32[8,32], index: 6, kind: input, shape index: {}]
  %s7 = inlined_call_operand.vmem [shape: f32[1,32], index: 7, kind: input, shape index: {}]
  %s8 = inlined_call_operand.vmem [shape: f32[1,32], index: 8, kind: input, shape index: {}]
  %s9 = inlined_call_operand.hbm [shape: f32[16,128], index: 9, kind: output, shape index: {}]
  %s10 = sld [smem:[#allocation0]]
  $region69: #{tpu_custom_call.1} parent=0
    _
  %s12 = ssub.s32 1, %s10
  %s13 = scalar_select 0, %s12, %s10
  $region1: #{tpu_custom_call.1} parent=0
    #allocation2 [shape = 'u8[8192]{0}', space=vmem, size = 0x2000, scoped, tag = 'output window, operand 0']
    #allocation3 [shape = 's32[2]{0}', space=sflag, size = 0x8, scoped, tag = 'scoped memory for tpu_custom_call.1']
    %14 = vsyncpa [#allocation3], 0
    %s15 = scalar_lea.sflag [#allocation3], 1
    %16 = vsyncpa %s15, 0
    loop: start=0, step=1, limit=4
    $region2: #{tpu_custom_call.1} parent=1 // loop_pre_header
      _
    $region3: #{tpu_custom_call.1} parent=1 // loop_header
      %s18 = sphi 0, %s22
      %p19 = scmp.ge.s32.totalorder %s18, 4
      %s28 = sphi 0, %s30
      %s31 = sphi 0, %s28
      %s32 = sphi 0, %s31
      %s48 = sphi 0, %s32
      %s54 = sphi 0, %s56
      %s57 = sphi 0, %s54
      %s58 = sphi 0, %s57
      %s74 = sphi 0, %s58
      %s80 = sphi 0, %s82
      %s83 = sphi 0, %s80
      %s84 = sphi 0, %s83
      %s100 = sphi 0, %s84
      %s106 = sphi 0, %s108
      %s109 = sphi 0, %s106
      %s110 = sphi 0, %s109
      %s126 = sphi 0, %s110
      %s130 = sphi 0, %s130
      %s132 = sphi 0, %s130
      %s133 = sphi 0, %s132
      %s147 = sphi 0, %s133
      %s151 = sphi 0, %s151
      %s153 = sphi 0, %s151
      %s154 = sphi 0, %s153
      %s168 = sphi 0, %s154
      %s172 = sphi 0, %s172
      %s174 = sphi 0, %s172
      %s175 = sphi 0, %s174
      %s189 = sphi 0, %s175
      %s193 = sphi 0, %s193
      %s195 = sphi 0, %s193
      %s196 = sphi 0, %s195
      %s210 = sphi 0, %s196
      %s214 = sphi 0, %s214
      %s216 = sphi 0, %s214
      %s217 = sphi 0, %s216
      %s231 = sphi 0, %s217
      %s237 = sphi 0, %s239
      %s240 = sphi 0, %s237
      %s241 = sphi 0, %s240
      %s257 = sphi 0, %s241
    $region4: #{tpu_custom_call.1} parent=1 // loop_header_branch
      %21 = sbr.rel (%p19) target = $region8
    $region5: #{tpu_custom_call.1} parent=1 // loop_body
      %s23 = ssub.s32 %s18, 1
      %s24 = ssub.s32 %s18, 2
      %s25 = sadd.s32 %s18, 1
      %s26 = ssub.s32 %s18, %s25
      %p27 = scmp.eq.s32.totalorder %s26, 0
      %s29 = sadd.s32 %s28, 1
      %s30 = scalar_select %p27, %s28, %s29
      %p33 = pneg %p27
      %p34 = scmp.eq.s32.totalorder %s18, 1
      %p35 = por %p33, %p34
      %p36 = scmp.ne.s32.totalorder %s28, %s31
      %p37 = scmp.eq.s32.totalorder %s18, 0
      %p38 = por %p36, %p37
      %p39 = scmp.ne.s32.totalorder %s28, %s31
      %p40 = scmp.eq.s32.totalorder %s23, 1
      %p41 = por %p39, %p40
      %p42 = scmp.ne.s32.totalorder %s31, %s32
      %p43 = scmp.eq.s32.totalorder %s23, 0
      %p44 = por %p42, %p43
      %p45 = scmp.ne.s32.totalorder %s31, %s32
      %p46 = scmp.eq.s32.totalorder %s24, 1
      %p47 = por %p45, %p46
      %p49 = scmp.ne.s32.totalorder %s32, %s48
      %p50 = scmp.eq.s32.totalorder %s24, 0
      %p51 = por %p49, %p50
      %s52 = ssub.s32 %s18, %s25
      %p53 = scmp.eq.s32.totalorder %s52, 0
      %s55 = sadd.s32 %s54, 1
      %s56 = scalar_select %p53, %s54, %s55
      %p59 = pneg %p53
      %p60 = scmp.eq.s32.totalorder %s18, 1
      %p61 = por %p59, %p60
      %p62 = scmp.ne.s32.totalorder %s54, %s57
      %p63 = scmp.eq.s32.totalorder %s18, 0
      %p64 = por %p62, %p63
      %p65 = scmp.ne.s32.totalorder %s54, %s57
      %p66 = scmp.eq.s32.totalorder %s23, 1
      %p67 = por %p65, %p66
      %p68 = scmp.ne.s32.totalorder %s57, %s58
      %p69 = scmp.eq.s32.totalorder %s23, 0
      %p70 = por %p68, %p69
      %p71 = scmp.ne.s32.totalorder %s57, %s58
      %p72 = scmp.eq.s32.totalorder %s24, 1
      %p73 = por %p71, %p72
      %p75 = scmp.ne.s32.totalorder %s58, %s74
      %p76 = scmp.eq.s32.totalorder %s24, 0
      %p77 = por %p75, %p76
      %s78 = ssub.s32 %s18, %s25
      %p79 = scmp.eq.s32.totalorder %s78, 0
      %s81 = sadd.s32 %s80, 1
      %s82 = scalar_select %p79, %s80, %s81
      %p85 = pneg %p79
      %p86 = scmp.eq.s32.totalorder %s18, 1
      %p87 = por %p85, %p86
      %p88 = scmp.ne.s32.totalorder %s80, %s83
      %p89 = scmp.eq.s32.totalorder %s18, 0
      %p90 = por %p88, %p89
      %p91 = scmp.ne.s32.totalorder %s80, %s83
      %p92 = scmp.eq.s32.totalorder %s23, 1
      %p93 = por %p91, %p92
      %p94 = scmp.ne.s32.totalorder %s83, %s84
      %p95 = scmp.eq.s32.totalorder %s23, 0
      %p96 = por %p94, %p95
      %p97 = scmp.ne.s32.totalorder %s83, %s84
      %p98 = scmp.eq.s32.totalorder %s24, 1
      %p99 = por %p97, %p98
      %p101 = scmp.ne.s32.totalorder %s84, %s100
      %p102 = scmp.eq.s32.totalorder %s24, 0
      %p103 = por %p101, %p102
      %s104 = ssub.s32 %s18, %s25
      %p105 = scmp.eq.s32.totalorder %s104, 0
      %s107 = sadd.s32 %s106, 1
      %s108 = scalar_select %p105, %s106, %s107
      %p111 = pneg %p105
      %p112 = scmp.eq.s32.totalorder %s18, 1
      %p113 = por %p111, %p112
      %p114 = scmp.ne.s32.totalorder %s106, %s109
      %p115 = scmp.eq.s32.totalorder %s18, 0
      %p116 = por %p114, %p115
      %p117 = scmp.ne.s32.totalorder %s106, %s109
      %p118 = scmp.eq.s32.totalorder %s23, 1
      %p119 = por %p117, %p118
      %p120 = scmp.ne.s32.totalorder %s109, %s110
      %p121 = scmp.eq.s32.totalorder %s23, 0
      %p122 = por %p120, %p121
      %p123 = scmp.ne.s32.totalorder %s109, %s110
      %p124 = scmp.eq.s32.totalorder %s24, 1
      %p125 = por %p123, %p124
      %p127 = scmp.ne.s32.totalorder %s110, %s126
      %p128 = scmp.eq.s32.totalorder %s24, 0
      %p129 = por %p127, %p128
      %s131 = sadd.s32 %s130, 1
      %p134 = scmp.eq.s32.totalorder %s18, 1
      %p135 = scmp.ne.s32.totalorder %s130, %s132
      %p136 = scmp.eq.s32.totalorder %s18, 0
      %p137 = por %p135, %p136
      %p138 = scmp.ne.s32.totalorder %s130, %s132
      %p139 = scmp.eq.s32.totalorder %s23, 1
      %p140 = por %p138, %p139
      %p141 = scmp.ne.s32.totalorder %s132, %s133
      %p142 = scmp.eq.s32.totalorder %s23, 0
      %p143 = por %p141, %p142
      %p144 = scmp.ne.s32.totalorder %s132, %s133
      %p145 = scmp.eq.s32.totalorder %s24, 1
      %p146 = por %p144, %p145
      %p148 = scmp.ne.s32.totalorder %s133, %s147
      %p149 = scmp.eq.s32.totalorder %s24, 0
      %p150 = por %p148, %p149
      %s152 = sadd.s32 %s151, 1
      %p155 = scmp.eq.s32.totalorder %s18, 1
      %p156 = scmp.ne.s32.totalorder %s151, %s153
      %p157 = scmp.eq.s32.totalorder %s18, 0
      %p158 = por %p156, %p157
      %p159 = scmp.ne.s32.totalorder %s151, %s153
      %p160 = scmp.eq.s32.totalorder %s23, 1
      %p161 = por %p159, %p160
      %p162 = scmp.ne.s32.totalorder %s153, %s154
      %p163 = scmp.eq.s32.totalorder %s23, 0
      %p164 = por %p162, %p163
      %p165 = scmp.ne.s32.totalorder %s153, %s154
      %p166 = scmp.eq.s32.totalorder %s24, 1
      %p167 = por %p165, %p166
      %p169 = scmp.ne.s32.totalorder %s154, %s168
      %p170 = scmp.eq.s32.totalorder %s24, 0
      %p171 = por %p169, %p170
      %s173 = sadd.s32 %s172, 1
      %p176 = scmp.eq.s32.totalorder %s18, 1
      %p177 = scmp.ne.s32.totalorder %s172, %s174
      %p178 = scmp.eq.s32.totalorder %s18, 0
      %p179 = por %p177, %p178
      %p180 = scmp.ne.s32.totalorder %s172, %s174
      %p181 = scmp.eq.s32.totalorder %s23, 1
      %p182 = por %p180, %p181
      %p183 = scmp.ne.s32.totalorder %s174, %s175
      %p184 = scmp.eq.s32.totalorder %s23, 0
      %p185 = por %p183, %p184
      %p186 = scmp.ne.s32.totalorder %s174, %s175
      %p187 = scmp.eq.s32.totalorder %s24, 1
      %p188 = por %p186, %p187
      %p190 = scmp.ne.s32.totalorder %s175, %s189
      %p191 = scmp.eq.s32.totalorder %s24, 0
      %p192 = por %p190, %p191
      %s194 = sadd.s32 %s193, 1
      %p197 = scmp.eq.s32.totalorder %s18, 1
      %p198 = scmp.ne.s32.totalorder %s193, %s195
      %p199 = scmp.eq.s32.totalorder %s18, 0
      %p200 = por %p198, %p199
      %p201 = scmp.ne.s32.totalorder %s193, %s195
      %p202 = scmp.eq.s32.totalorder %s23, 1
      %p203 = por %p201, %p202
      %p204 = scmp.ne.s32.totalorder %s195, %s196
      %p205 = scmp.eq.s32.totalorder %s23, 0
      %p206 = por %p204, %p205
      %p207 = scmp.ne.s32.totalorder %s195, %s196
      %p208 = scmp.eq.s32.totalorder %s24, 1
      %p209 = por %p207, %p208
      %p211 = scmp.ne.s32.totalorder %s196, %s210
      %p212 = scmp.eq.s32.totalorder %s24, 0
      %p213 = por %p211, %p212
      %s215 = sadd.s32 %s214, 1
      %p218 = scmp.eq.s32.totalorder %s18, 1
      %p219 = scmp.ne.s32.totalorder %s214, %s216
      %p220 = scmp.eq.s32.totalorder %s18, 0
      %p221 = por %p219, %p220
      %p222 = scmp.ne.s32.totalorder %s214, %s216
      %p223 = scmp.eq.s32.totalorder %s23, 1
      %p224 = por %p222, %p223
      %p225 = scmp.ne.s32.totalorder %s216, %s217
      %p226 = scmp.eq.s32.totalorder %s23, 0
      %p227 = por %p225, %p226
      %p228 = scmp.ne.s32.totalorder %s216, %s217
      %p229 = scmp.eq.s32.totalorder %s24, 1
      %p230 = por %p228, %p229
      %p232 = scmp.ne.s32.totalorder %s217, %s231
      %p233 = scmp.eq.s32.totalorder %s24, 0
      %p234 = por %p232, %p233
      %s235 = ssub.s32 %s18, %s25
      %p236 = scmp.eq.s32.totalorder %s235, 0
      %s238 = sadd.s32 %s237, 1
      %s239 = scalar_select %p236, %s237, %s238
      %p242 = pneg %p236
      %p243 = scmp.eq.s32.totalorder %s18, 1
      %p244 = por %p242, %p243
      %p245 = scmp.ne.s32.totalorder %s237, %s240
      %p246 = scmp.eq.s32.totalorder %s18, 0
      %p247 = por %p245, %p246
      %p248 = scmp.ne.s32.totalorder %s237, %s240
      %p249 = scmp.eq.s32.totalorder %s23, 1
      %p250 = por %p248, %p249
      %p251 = scmp.ne.s32.totalorder %s240, %s241
      %p252 = scmp.eq.s32.totalorder %s23, 0
      %p253 = por %p251, %p252
      %p254 = scmp.ne.s32.totalorder %s240, %s241
      %p255 = scmp.eq.s32.totalorder %s24, 1
      %p256 = por %p254, %p255
      %p258 = scmp.ne.s32.totalorder %s241, %s257
      %p259 = scmp.eq.s32.totalorder %s24, 0
      %p260 = por %p258, %p259
      %p261 = scmp.le.s32.totalorder 1, %s18
      %p262 = scmp.lt.s32.totalorder %s18, 3
      %p263 = pnand %p261, %p262
      %p264 = pneg %p263
      // Predicated region
      $region9: #{tpu_custom_call.1} parent=5 // pred_check
        _
      $region10: #{tpu_custom_call.1} parent=5 // pred_check_branch
        %266 = sbr.rel (%p263) target = $region12
      $region11: #{tpu_custom_call.1} parent=5 // pred_region
        %s267 = ssub.s32 %s18, 1
        // Predicated region
        $region13: #{tpu_custom_call.1} parent=11 // pred_check
          %p268 = pneg %p143
        $region14: #{tpu_custom_call.1} parent=11 // pred_check_branch
          %270 = sbr.rel (%p268) target = $region16
        $region15: #{tpu_custom_call.1} parent=11 // pred_region
          _
        $region16: #{tpu_custom_call.1} parent=11 // pred_fallthru
          _
        // Predicated region
        $region17: #{tpu_custom_call.1} parent=11 // pred_check
          %p271 = pneg %p164
        $region18: #{tpu_custom_call.1} parent=11 // pred_check_branch
          %273 = sbr.rel (%p271) target = $region20
        $region19: #{tpu_custom_call.1} parent=11 // pred_region
          _
        $region20: #{tpu_custom_call.1} parent=11 // pred_fallthru
          _
        // Predicated region
        $region21: #{tpu_custom_call.1} parent=11 // pred_check
          %p274 = pneg %p185
        $region22: #{tpu_custom_call.1} parent=11 // pred_check_branch
          %276 = sbr.rel (%p274) target = $region24
        $region23: #{tpu_custom_call.1} parent=11 // pred_region
          _
        $region24: #{tpu_custom_call.1} parent=11 // pred_fallthru
          _
        // Predicated region
        $region25: #{tpu_custom_call.1} parent=11 // pred_check
          %p277 = pneg %p206
        $region26: #{tpu_custom_call.1} parent=11 // pred_check_branch
          %279 = sbr.rel (%p277) target = $region28
        $region27: #{tpu_custom_call.1} parent=11 // pred_region
          _
        $region28: #{tpu_custom_call.1} parent=11 // pred_fallthru
          _
        // Predicated region
        $region29: #{tpu_custom_call.1} parent=11 // pred_check
          %p280 = pneg %p227
        $region30: #{tpu_custom_call.1} parent=11 // pred_check_branch
          %282 = sbr.rel (%p280) target = $region32
        $region31: #{tpu_custom_call.1} parent=11 // pred_region
          _
        $region32: #{tpu_custom_call.1} parent=11 // pred_fallthru
          _
      $region12: #{tpu_custom_call.1} parent=5 // pred_fallthru
        _
      %p283 = scmp.lt.s32.totalorder %s18, 2
      // Predicated region
      $region33: #{tpu_custom_call.1} parent=5 // pred_check
        %p284 = pneg %p283
      $region34: #{tpu_custom_call.1} parent=5 // pred_check_branch
        %286 = sbr.rel (%p284) target = $region36
      $region35: #{tpu_custom_call.1} parent=5 // pred_region
        // Predicated region
        $region37: #{tpu_custom_call.1} parent=35 // pred_check
          %p287 = pneg %p38
        $region38: #{tpu_custom_call.1} parent=35 // pred_check_branch
          %289 = sbr.rel (%p287) target = $region40
        $region39: #{tpu_custom_call.1} parent=35 // pred_region
          %p290 = scmp.lt.s32.totalorder %s18, 1
          %s291 = scalar_select %p290, %s18, 1
          %s292 = smul.addr %s291, 8
          %s293 = scalar_lea.vmem %s0, %s292
        $region40: #{tpu_custom_call.1} parent=35 // pred_fallthru
          _
        // Predicated region
        $region41: #{tpu_custom_call.1} parent=35 // pred_check
          %p294 = pneg %p64
        $region42: #{tpu_custom_call.1} parent=35 // pred_check_branch
          %296 = sbr.rel (%p294) target = $region44
        $region43: #{tpu_custom_call.1} parent=35 // pred_region
          %p297 = scmp.lt.s32.totalorder %s18, 1
          %s298 = scalar_select %p297, %s18, 1
          %s299 = smul.addr %s298, 8
          %s300 = scalar_lea.vmem %s1, %s299
        $region44: #{tpu_custom_call.1} parent=35 // pred_fallthru
          _
        // Predicated region
        $region45: #{tpu_custom_call.1} parent=35 // pred_check
          %p301 = pneg %p90
        $region46: #{tpu_custom_call.1} parent=35 // pred_check_branch
          %303 = sbr.rel (%p301) target = $region48
        $region47: #{tpu_custom_call.1} parent=35 // pred_region
          %p304 = scmp.lt.s32.totalorder %s18, 1
          %s305 = scalar_select %p304, %s18, 1
          %s306 = smul.addr %s305, 8
          %s307 = scalar_lea.vmem %s2, %s306
        $region48: #{tpu_custom_call.1} parent=35 // pred_fallthru
          _
        // Predicated region
        $region49: #{tpu_custom_call.1} parent=35 // pred_check
          %p308 = pneg %p116
        $region50: #{tpu_custom_call.1} parent=35 // pred_check_branch
          %310 = sbr.rel (%p308) target = $region52
        $region51: #{tpu_custom_call.1} parent=35 // pred_region
          %p311 = scmp.lt.s32.totalorder %s18, 1
          %s312 = scalar_select %p311, %s18, 1
          %s313 = smul.addr %s312, 8
          %s314 = scalar_lea.vmem %s3, %s313
        $region52: #{tpu_custom_call.1} parent=35 // pred_fallthru
          _
      $region36: #{tpu_custom_call.1} parent=5 // pred_fallthru
        _
      %p315 = scmp.le.s32.totalorder 1, %s18
      %p316 = scmp.lt.s32.totalorder %s18, 3
      %p317 = pnand %p315, %p316
      %p318 = pneg %p317
      // Predicated region
      $region53: #{tpu_custom_call.1} parent=5 // pred_check
        _
      $region54: #{tpu_custom_call.1} parent=5 // pred_check_branch
        %320 = sbr.rel (%p317) target = $region56
      $region55: #{tpu_custom_call.1} parent=5 // pred_region
        %s321 = ssub.s32 %s18, 1
        %p322 = scmp.lt.s32.totalorder %s23, 1
        %s323 = scalar_select %p322, %s23, 1
        %s324 = smul.addr %s323, 8
        %s325 = scalar_lea.vmem %s0, %s324
        %p326 = pneg %p44
        %p327 = pneg %p41
        %p328 = scmp.lt.s32.totalorder %s23, 1
        %s329 = scalar_select %p328, %s23, 1
        %s330 = smul.addr %s329, 8
        %s331 = scalar_lea.vmem %s1, %s330
        %p332 = pneg %p70
        %p333 = pneg %p67
        %p334 = scmp.lt.s32.totalorder %s23, 1
        %s335 = scalar_select %p334, %s23, 1
        %s336 = smul.addr %s335, 8
        %s337 = scalar_lea.vmem %s2, %s336
        %p338 = pneg %p96
        %p339 = pneg %p93
        %p340 = scmp.lt.s32.totalorder %s23, 1
        %s341 = scalar_select %p340, %s23, 1
        %s342 = smul.addr %s341, 8
        %s343 = scalar_lea.vmem %s3, %s342
        %p344 = pneg %p122
        %p345 = pneg %p119
        %p346 = pneg %p143
        %p347 = pneg %p140
        %p348 = pneg %p164
        %p349 = pneg %p161
        %p350 = pneg %p185
        %p351 = pneg %p182
        %p352 = pneg %p206
        %p353 = pneg %p203
        %p354 = pneg %p227
        %p355 = pneg %p224
        %p356 = pneg %p253
        %p357 = pneg %p250
        %s358 = sand.u32 %s240, 1
        %s359 = scalar_lea.sflag [#allocation3], %s358
        %s360 = sand.u32 %s240, 1
        %s361 = smul.addr %s360, 8
        %s362 = scalar_lea.vmem [#allocation2], %s361
        %p363 = scmp.lt.s32.totalorder %s23, 1
        %s364 = scalar_select %p363, %s23, 1
        %s365 = smul.addr %s364, 8
        %s366 = scalar_lea.vmem %s0, %s365
        %p367 = scmp.lt.s32.totalorder %s23, 1
        %s368 = scalar_select %p367, %s23, 1
        %s369 = smul.addr %s368, 8
        %s370 = scalar_lea.vmem %s1, %s369
        %p371 = scmp.lt.s32.totalorder %s23, 1
        %s372 = scalar_select %p371, %s23, 1
        %s373 = smul.addr %s372, 8
        %s374 = scalar_lea.vmem %s2, %s373
        %p375 = scmp.lt.s32.totalorder %s23, 1
        %s376 = scalar_select %p375, %s23, 1
        %s377 = smul.addr %s376, 8
        %s378 = scalar_lea.vmem %s3, %s377
        %v379 = vld [vmem:[%s7] sm:$0x1]
        %v380 = vld [vmem:[%s8] sm:$0x1]
        %v381 = vld [vmem:[%s366] sm:$0xff]
        %v382 = vld [vmem:[%s4] sm:$0xff]
        %v383 = vld [vmem:[%s4 + $0x8] sm:$0xff]
        %v384 = vld [vmem:[%s4 + $0x10] sm:$0xff]
        %v385 = vlaneseq
        %v386 = vand.u32 %v385, 127
        %387 = vset.pattern.permute.xlu0 0
        %388 = vperm.xlu0 %387, %v381
        %v389 = vpop.permute.xlu0 %388
        %vm390 = vcmp.eq.s32.totalorder %v389, %v386
        %v391 = vsel %vm390, 1, 0
        %v392 = vcvt.s32.f32 %v391
        %vm393 = vcmask 195584
        %v395 = vsel %vm393, %v392, 0
        %397 = vmatprep.subr.mxu0 0.0
        %398 = vmatpush1.msra.mxu0 0.0
        %399 = vmatprep.subr.mxu0 0.0
        %400 = vmatpush1.msra.mxu0 0.0
        %401 = vmatprep.subr.mxu0 0.0
        %402 = vmatpush1.msra.mxu0 0.0
        %403 = vmatprep.subr.mxu0 0.0
        %404 = vmatpush1.msra.mxu0 0.0
        %405 = vmatprep.subr.mxu0 0.0
        %406 = vmatpush1.msra.mxu0 0.0
        %407 = vmatprep.subr.mxu0 0.0
        %408 = vmatpush1.msra.mxu0 0.0
        %409 = vmatprep.subr.mxu0 0.0
        %410 = vmatpush1.msra.mxu0 0.0
        %411 = vmatprep.subr.mxu0 0.0
        %412 = vmatpush1.msra.mxu0 0.0
        %413 = vmatprep.subr.mxu0 0.0
        %414 = vmatpush1.msra.mxu0 0.0
        %415 = vmatprep.subr.mxu0 0.0
        %416 = vmatpush1.msra.mxu0 0.0
        %417 = vmatprep.subr.mxu0 0.0
        %418 = vmatpush1.msra.mxu0 0.0
        %419 = vmatprep.subr.mxu0 0.0
        %420 = vmatpush1.msra.mxu0 0.0
        %421 = vmatprep.subr.mxu0 0.0
        %422 = vmatpush1.msra.mxu0 0.0
        %423 = vmatprep.subr.mxu0 0.0
        %v424 = vand.u32 %v384, 4294901760
        %425 = vmatpush1.msra.mxu0 %v424
        %426 = vmatprep.subr.mxu0 0.0
        %v427 = vand.u32 %v383, 4294901760
        %428 = vmatpush1.msra.mxu0 %v427
        %429 = vmatprep.subr.mxu0 0.0
        %v430 = vand.u32 %v382, 4294901760
        %431 = vmatpush1.msra.mxu0 %v430
        %432 = vmatprep.subr.mxu0 0.0
        %433 = vmatpush2.msra.mxu0 0.0
        %434 = vmatprep.subr.mxu0 0.0
        %435 = vmatpush2.msra.mxu0 0.0
        %436 = vmatprep.subr.mxu0 0.0
        %437 = vmatpush2.msra.mxu0 0.0
        %438 = vmatprep.subr.mxu0 0.0
        %439 = vmatpush2.msra.mxu0 0.0
        %440 = vmatprep.subr.mxu0 0.0
        %441 = vmatpush2.msra.mxu0 0.0
        %442 = vmatprep.subr.mxu0 0.0
        %443 = vmatpush2.msra.mxu0 0.0
        %444 = vmatprep.subr.mxu0 0.0
        %445 = vmatpush2.msra.mxu0 0.0
        %446 = vmatprep.subr.mxu0 0.0
        %447 = vmatpush2.msra.mxu0 0.0
        %448 = vmatprep.subr.mxu0 0.0
        %449 = vmatpush2.msra.mxu0 0.0
        %450 = vmatprep.subr.mxu0 0.0
        %451 = vmatpush2.msra.mxu0 0.0
        %452 = vmatprep.subr.mxu0 0.0
        %453 = vmatpush2.msra.mxu0 0.0
        %454 = vmatprep.subr.mxu0 0.0
        %455 = vmatpush2.msra.mxu0 0.0
        %456 = vmatprep.subr.mxu0 0.0
        %457 = vmatpush2.msra.mxu0 0.0
        %458 = vmatprep.subr.mxu0 0.0
        %459 = vmatpush2.msra.mxu0 0.0
        %460 = vmatprep.subr.mxu0 0.0
        %461 = vmatpush2.msra.mxu0 0.0
        %462 = vmatprep.subr.mxu0 0.0
        %463 = vmatpush2.msra.mxu0 0.0
        %464 = vmatprep.mubr.f32.mxu0 0.0
        %v465 = vand.u32 %v395, 4294901760
        %v466 = vsub.f32 %v395, %v465
        %v467 = vand.u32 %v466, 4294901760
        %v468 = vsub.f32 %v466, %v467
        %v469 = vand.u32 %v468, 4294901760
        %470 = vmatmul.mubr.f32.gmra.mxu0 %v469
        %v471 = vpop.f32.mrf.mxu0
        %v472 = vadd.f32 0.0, %v471
        %v473 = vpop.f32.mrf.mxu0
        %474 = vdwg.mxu0
        %475 = vmatprep.subr.mxu0 0.0
        %476 = vmatpush1.msra.mxu0 0.0
        %477 = vmatprep.subr.mxu0 0.0
        %478 = vmatpush1.msra.mxu0 0.0
        %479 = vmatprep.subr.mxu0 0.0
        %480 = vmatpush1.msra.mxu0 0.0
        %481 = vmatprep.subr.mxu0 0.0
        %482 = vmatpush1.msra.mxu0 0.0
        %483 = vmatprep.subr.mxu0 0.0
        %484 = vmatpush1.msra.mxu0 0.0
        %485 = vmatprep.subr.mxu0 0.0
        %486 = vmatpush1.msra.mxu0 0.0
        %487 = vmatprep.subr.mxu0 0.0
        %488 = vmatpush1.msra.mxu0 0.0
        %489 = vmatprep.subr.mxu0 0.0
        %490 = vmatpush1.msra.mxu0 0.0
        %491 = vmatprep.subr.mxu0 0.0
        %492 = vmatpush1.msra.mxu0 0.0
        %493 = vmatprep.subr.mxu0 0.0
        %494 = vmatpush1.msra.mxu0 0.0
        %495 = vmatprep.subr.mxu0 0.0
        %496 = vmatpush1.msra.mxu0 0.0
        %497 = vmatprep.subr.mxu0 0.0
        %498 = vmatpush1.msra.mxu0 0.0
        %499 = vmatprep.subr.mxu0 0.0
        %500 = vmatpush1.msra.mxu0 0.0
        %501 = vmatprep.subr.mxu0 0.0
        %v502 = vand.u32 %v384, 4294901760
        %v503 = vsub.f32 %v384, %v502
        %v504 = vand.u32 %v503, 4294901760
        %v505 = vsub.f32 %v503, %v504
        %v506 = vand.u32 %v505, 4294901760
        %507 = vmatpush1.msra.mxu0 %v506
        %508 = vmatprep.subr.mxu0 0.0
        %v509 = vand.u32 %v383, 4294901760
        %v510 = vsub.f32 %v383, %v509
        %v511 = vand.u32 %v510, 4294901760
        %v512 = vsub.f32 %v510, %v511
        %v513 = vand.u32 %v512, 4294901760
        %514 = vmatpush1.msra.mxu0 %v513
        %515 = vmatprep.subr.mxu0 0.0
        %v516 = vand.u32 %v382, 4294901760
        %v517 = vsub.f32 %v382, %v516
        %v518 = vand.u32 %v517, 4294901760
        %v519 = vsub.f32 %v517, %v518
        %v520 = vand.u32 %v519, 4294901760
        %521 = vmatpush1.msra.mxu0 %v520
        %522 = vmatprep.subr.mxu0 0.0
        %523 = vmatpush2.msra.mxu0 0.0
        %524 = vmatprep.subr.mxu0 0.0
        %525 = vmatpush2.msra.mxu0 0.0
        %526 = vmatprep.subr.mxu0 0.0
        %527 = vmatpush2.msra.mxu0 0.0
        %528 = vmatprep.subr.mxu0 0.0
        %529 = vmatpush2.msra.mxu0 0.0
        %530 = vmatprep.subr.mxu0 0.0
        %531 = vmatpush2.msra.mxu0 0.0
        %532 = vmatprep.subr.mxu0 0.0
        %533 = vmatpush2.msra.mxu0 0.0
        %534 = vmatprep.subr.mxu0 0.0
        %535 = vmatpush2.msra.mxu0 0.0
        %536 = vmatprep.subr.mxu0 0.0
        %537 = vmatpush2.msra.mxu0 0.0
        %538 = vmatprep.subr.mxu0 0.0
        %539 = vmatpush2.msra.mxu0 0.0
        %540 = vmatprep.subr.mxu0 0.0
        %541 = vmatpush2.msra.mxu0 0.0
        %542 = vmatprep.subr.mxu0 0.0
        %543 = vmatpush2.msra.mxu0 0.0
        %544 = vmatprep.subr.mxu0 0.0
        %545 = vmatpush2.msra.mxu0 0.0
        %546 = vmatprep.subr.mxu0 0.0
        %547 = vmatpush2.msra.mxu0 0.0
        %548 = vmatprep.subr.mxu0 0.0
        %549 = vmatpush2.msra.mxu0 0.0
        %550 = vmatprep.subr.mxu0 0.0
        %551 = vmatpush2.msra.mxu0 0.0
        %552 = vmatprep.subr.mxu0 0.0
        %553 = vmatpush2.msra.mxu0 0.0
        %554 = vmatprep.mubr.f32.mxu0 0.0
        %v555 = vand.u32 %v395, 4294901760
        %556 = vmatmul.mubr.f32.gmra.mxu0 %v555
        %v557 = vpop.f32.mrf.mxu0
        %v558 = vadd.f32 %v472, %v557
        %v559 = vpop.f32.mrf.mxu0
        %560 = vdwg.mxu0
        %561 = vmatprep.subr.mxu0 0.0
        %562 = vmatpush1.msra.mxu0 0.0
        %563 = vmatprep.subr.mxu0 0.0
        %564 = vmatpush1.msra.mxu0 0.0
        %565 = vmatprep.subr.mxu0 0.0
        %566 = vmatpush1.msra.mxu0 0.0
        %567 = vmatprep.subr.mxu0 0.0
        %568 = vmatpush1.msra.mxu0 0.0
        %569 = vmatprep.subr.mxu0 0.0
        %570 = vmatpush1.msra.mxu0 0.0
        %571 = vmatprep.subr.mxu0 0.0
        %572 = vmatpush1.msra.mxu0 0.0
        %573 = vmatprep.subr.mxu0 0.0
        %574 = vmatpush1.msra.mxu0 0.0
        %575 = vmatprep.subr.mxu0 0.0
        %576 = vmatpush1.msra.mxu0 0.0
        %577 = vmatprep.subr.mxu0 0.0
        %578 = vmatpush1.msra.mxu0 0.0
        %579 = vmatprep.subr.mxu0 0.0
        %580 = vmatpush1.msra.mxu0 0.0
        %581 = vmatprep.subr.mxu0 0.0
        %582 = vmatpush1.msra.mxu0 0.0
        %583 = vmatprep.subr.mxu0 0.0
        %584 = vmatpush1.msra.mxu0 0.0
        %585 = vmatprep.subr.mxu0 0.0
        %586 = vmatpush1.msra.mxu0 0.0
        %587 = vmatprep.subr.mxu0 0.0
        %v588 = vand.u32 %v384, 4294901760
        %v589 = vsub.f32 %v384, %v588
        %590 = vmatpush1.msra.mxu0 %v589
        %591 = vmatprep.subr.mxu0 0.0
        %v592 = vand.u32 %v383, 4294901760
        %v593 = vsub.f32 %v383, %v592
        %594 = vmatpush1.msra.mxu0 %v593
        %595 = vmatprep.subr.mxu0 0.0
        %v596 = vand.u32 %v382, 4294901760
        %v597 = vsub.f32 %v382, %v596
        %598 = vmatpush1.msra.mxu0 %v597
        %599 = vmatprep.subr.mxu0 0.0
        %600 = vmatpush2.msra.mxu0 0.0
        %601 = vmatprep.subr.mxu0 0.0
        %602 = vmatpush2.msra.mxu0 0.0
        %603 = vmatprep.subr.mxu0 0.0
        %604 = vmatpush2.msra.mxu0 0.0
        %605 = vmatprep.subr.mxu0 0.0
        %606 = vmatpush2.msra.mxu0 0.0
        %607 = vmatprep.subr.mxu0 0.0
        %608 = vmatpush2.msra.mxu0 0.0
        %609 = vmatprep.subr.mxu0 0.0
        %610 = vmatpush2.msra.mxu0 0.0
        %611 = vmatprep.subr.mxu0 0.0
        %612 = vmatpush2.msra.mxu0 0.0
        %613 = vmatprep.subr.mxu0 0.0
        %614 = vmatpush2.msra.mxu0 0.0
        %615 = vmatprep.subr.mxu0 0.0
        %616 = vmatpush2.msra.mxu0 0.0
        %617 = vmatprep.subr.mxu0 0.0
        %618 = vmatpush2.msra.mxu0 0.0
        %619 = vmatprep.subr.mxu0 0.0
        %620 = vmatpush2.msra.mxu0 0.0
        %621 = vmatprep.subr.mxu0 0.0
        %622 = vmatpush2.msra.mxu0 0.0
        %623 = vmatprep.subr.mxu0 0.0
        %624 = vmatpush2.msra.mxu0 0.0
        %625 = vmatprep.subr.mxu0 0.0
        %626 = vmatpush2.msra.mxu0 0.0
        %627 = vmatprep.subr.mxu0 0.0
        %628 = vmatpush2.msra.mxu0 0.0
        %629 = vmatprep.subr.mxu0 0.0
        %630 = vmatpush2.msra.mxu0 0.0
        %631 = vmatprep.mubr.f32.mxu0 0.0
        %v632 = vand.u32 %v395, 4294901760
        %v633 = vsub.f32 %v395, %v632
        %634 = vmatmul.mubr.f32.gmra.mxu0 %v633
        %v635 = vpop.f32.mrf.mxu0
        %v636 = vadd.f32 %v558, %v635
        %v637 = vpop.f32.mrf.mxu0
        %638 = vdwg.mxu0
        %639 = vmatprep.subr.mxu0 0.0
        %640 = vmatpush1.msra.mxu0 0.0
        %641 = vmatprep.subr.mxu0 0.0
        %642 = vmatpush1.msra.mxu0 0.0
        %643 = vmatprep.subr.mxu0 0.0
        %644 = vmatpush1.msra.mxu0 0.0
        %645 = vmatprep.subr.mxu0 0.0
        %646 = vmatpush1.msra.mxu0 0.0
        %647 = vmatprep.subr.mxu0 0.0
        %648 = vmatpush1.msra.mxu0 0.0
        %649 = vmatprep.subr.mxu0 0.0
        %650 = vmatpush1.msra.mxu0 0.0
        %651 = vmatprep.subr.mxu0 0.0
        %652 = vmatpush1.msra.mxu0 0.0
        %653 = vmatprep.subr.mxu0 0.0
        %654 = vmatpush1.msra.mxu0 0.0
        %655 = vmatprep.subr.mxu0 0.0
        %656 = vmatpush1.msra.mxu0 0.0
        %657 = vmatprep.subr.mxu0 0.0
        %658 = vmatpush1.msra.mxu0 0.0
        %659 = vmatprep.subr.mxu0 0.0
        %660 = vmatpush1.msra.mxu0 0.0
        %661 = vmatprep.subr.mxu0 0.0
        %662 = vmatpush1.msra.mxu0 0.0
        %663 = vmatprep.subr.mxu0 0.0
        %664 = vmatpush1.msra.mxu0 0.0
        %665 = vmatprep.subr.mxu0 0.0
        %v666 = vand.u32 %v384, 4294901760
        %667 = vmatpush1.msra.mxu0 %v666
        %668 = vmatprep.subr.mxu0 0.0
        %v669 = vand.u32 %v383, 4294901760
        %670 = vmatpush1.msra.mxu0 %v669
        %671 = vmatprep.subr.mxu0 0.0
        %v672 = vand.u32 %v382, 4294901760
        %673 = vmatpush1.msra.mxu0 %v672
        %674 = vmatprep.subr.mxu0 0.0
        %675 = vmatpush2.msra.mxu0 0.0
        %676 = vmatprep.subr.mxu0 0.0
        %677 = vmatpush2.msra.mxu0 0.0
        %678 = vmatprep.subr.mxu0 0.0
        %679 = vmatpush2.msra.mxu0 0.0
        %680 = vmatprep.subr.mxu0 0.0
        %681 = vmatpush2.msra.mxu0 0.0
        %682 = vmatprep.subr.mxu0 0.0
        %683 = vmatpush2.msra.mxu0 0.0
        %684 = vmatprep.subr.mxu0 0.0
        %685 = vmatpush2.msra.mxu0 0.0
        %686 = vmatprep.subr.mxu0 0.0
        %687 = vmatpush2.msra.mxu0 0.0
        %688 = vmatprep.subr.mxu0 0.0
        %689 = vmatpush2.msra.mxu0 0.0
        %690 = vmatprep.subr.mxu0 0.0
        %691 = vmatpush2.msra.mxu0 0.0
        %692 = vmatprep.subr.mxu0 0.0
        %693 = vmatpush2.msra.mxu0 0.0
        %694 = vmatprep.subr.mxu0 0.0
        %695 = vmatpush2.msra.mxu0 0.0
        %696 = vmatprep.subr.mxu0 0.0
        %697 = vmatpush2.msra.mxu0 0.0
        %698 = vmatprep.subr.mxu0 0.0
        %699 = vmatpush2.msra.mxu0 0.0
        %700 = vmatprep.subr.mxu0 0.0
        %701 = vmatpush2.msra.mxu0 0.0
        %702 = vmatprep.subr.mxu0 0.0
        %703 = vmatpush2.msra.mxu0 0.0
        %704 = vmatprep.subr.mxu0 0.0
        %705 = vmatpush2.msra.mxu0 0.0
        %706 = vmatprep.mubr.f32.mxu0 0.0
        %v707 = vand.u32 %v395, 4294901760
        %v708 = vsub.f32 %v395, %v707
        %v709 = vand.u32 %v708, 4294901760
        %710 = vmatmul.mubr.f32.gmra.mxu0 %v709
        %v711 = vpop.f32.mrf.mxu0
        %v712 = vadd.f32 %v636, %v711
        %v713 = vpop.f32.mrf.mxu0
        %714 = vdwg.mxu0
        %715 = vmatprep.subr.mxu0 0.0
        %716 = vmatpush1.msra.mxu0 0.0
        %717 = vmatprep.subr.mxu0 0.0
        %718 = vmatpush1.msra.mxu0 0.0
        %719 = vmatprep.subr.mxu0 0.0
        %720 = vmatpush1.msra.mxu0 0.0
        %721 = vmatprep.subr.mxu0 0.0
        %722 = vmatpush1.msra.mxu0 0.0
        %723 = vmatprep.subr.mxu0 0.0
        %724 = vmatpush1.msra.mxu0 0.0
        %725 = vmatprep.subr.mxu0 0.0
        %726 = vmatpush1.msra.mxu0 0.0
        %727 = vmatprep.subr.mxu0 0.0
        %728 = vmatpush1.msra.mxu0 0.0
        %729 = vmatprep.subr.mxu0 0.0
        %730 = vmatpush1.msra.mxu0 0.0
        %731 = vmatprep.subr.mxu0 0.0
        %732 = vmatpush1.msra.mxu0 0.0
        %733 = vmatprep.subr.mxu0 0.0
        %734 = vmatpush1.msra.mxu0 0.0
        %735 = vmatprep.subr.mxu0 0.0
        %736 = vmatpush1.msra.mxu0 0.0
        %737 = vmatprep.subr.mxu0 0.0
        %738 = vmatpush1.msra.mxu0 0.0
        %739 = vmatprep.subr.mxu0 0.0
        %740 = vmatpush1.msra.mxu0 0.0
        %741 = vmatprep.subr.mxu0 0.0
        %v742 = vand.u32 %v384, 4294901760
        %v743 = vsub.f32 %v384, %v742
        %v744 = vand.u32 %v743, 4294901760
        %745 = vmatpush1.msra.mxu0 %v744
        %746 = vmatprep.subr.mxu0 0.0
        %v747 = vand.u32 %v383, 4294901760
        %v748 = vsub.f32 %v383, %v747
        %v749 = vand.u32 %v748, 4294901760
        %750 = vmatpush1.msra.mxu0 %v749
        %751 = vmatprep.subr.mxu0 0.0
        %v752 = vand.u32 %v382, 4294901760
        %v753 = vsub.f32 %v382, %v752
        %v754 = vand.u32 %v753, 4294901760
        %755 = vmatpush1.msra.mxu0 %v754
        %756 = vmatprep.subr.mxu0 0.0
        %757 = vmatpush2.msra.mxu0 0.0
        %758 = vmatprep.subr.mxu0 0.0
        %759 = vmatpush2.msra.mxu0 0.0
        %760 = vmatprep.subr.mxu0 0.0
        %761 = vmatpush2.msra.mxu0 0.0
        %762 = vmatprep.subr.mxu0 0.0
        %763 = vmatpush2.msra.mxu0 0.0
        %764 = vmatprep.subr.mxu0 0.0
        %765 = vmatpush2.msra.mxu0 0.0
        %766 = vmatprep.subr.mxu0 0.0
        %767 = vmatpush2.msra.mxu0 0.0
        %768 = vmatprep.subr.mxu0 0.0
        %769 = vmatpush2.msra.mxu0 0.0
        %770 = vmatprep.subr.mxu0 0.0
        %771 = vmatpush2.msra.mxu0 0.0
        %772 = vmatprep.subr.mxu0 0.0
        %773 = vmatpush2.msra.mxu0 0.0
        %774 = vmatprep.subr.mxu0 0.0
        %775 = vmatpush2.msra.mxu0 0.0
        %776 = vmatprep.subr.mxu0 0.0
        %777 = vmatpush2.msra.mxu0 0.0
        %778 = vmatprep.subr.mxu0 0.0
        %779 = vmatpush2.msra.mxu0 0.0
        %780 = vmatprep.subr.mxu0 0.0
        %781 = vmatpush2.msra.mxu0 0.0
        %782 = vmatprep.subr.mxu0 0.0
        %783 = vmatpush2.msra.mxu0 0.0
        %784 = vmatprep.subr.mxu0 0.0
        %785 = vmatpush2.msra.mxu0 0.0
        %786 = vmatprep.subr.mxu0 0.0
        %787 = vmatpush2.msra.mxu0 0.0
        %788 = vmatprep.mubr.f32.mxu0 0.0
        %v789 = vand.u32 %v395, 4294901760
        %790 = vmatmul.mubr.f32.gmra.mxu0 %v789
        %v791 = vpop.f32.mrf.mxu0
        %v792 = vadd.f32 %v712, %v791
        %v793 = vpop.f32.mrf.mxu0
        %794 = vdwg.mxu0
        %795 = vmatprep.subr.mxu0 0.0
        %796 = vmatpush1.msra.mxu0 0.0
        %797 = vmatprep.subr.mxu0 0.0
        %798 = vmatpush1.msra.mxu0 0.0
        %799 = vmatprep.subr.mxu0 0.0
        %800 = vmatpush1.msra.mxu0 0.0
        %801 = vmatprep.subr.mxu0 0.0
        %802 = vmatpush1.msra.mxu0 0.0
        %803 = vmatprep.subr.mxu0 0.0
        %804 = vmatpush1.msra.mxu0 0.0
        %805 = vmatprep.subr.mxu0 0.0
        %806 = vmatpush1.msra.mxu0 0.0
        %807 = vmatprep.subr.mxu0 0.0
        %808 = vmatpush1.msra.mxu0 0.0
        %809 = vmatprep.subr.mxu0 0.0
        %810 = vmatpush1.msra.mxu0 0.0
        %811 = vmatprep.subr.mxu0 0.0
        %812 = vmatpush1.msra.mxu0 0.0
        %813 = vmatprep.subr.mxu0 0.0
        %814 = vmatpush1.msra.mxu0 0.0
        %815 = vmatprep.subr.mxu0 0.0
        %816 = vmatpush1.msra.mxu0 0.0
        %817 = vmatprep.subr.mxu0 0.0
        %818 = vmatpush1.msra.mxu0 0.0
        %819 = vmatprep.subr.mxu0 0.0
        %820 = vmatpush1.msra.mxu0 0.0
        %821 = vmatprep.subr.mxu0 0.0
        %v822 = vand.u32 %v384, 4294901760
        %823 = vmatpush1.msra.mxu0 %v822
        %824 = vmatprep.subr.mxu0 0.0
        %v825 = vand.u32 %v383, 4294901760
        %826 = vmatpush1.msra.mxu0 %v825
        %827 = vmatprep.subr.mxu0 0.0
        %v828 = vand.u32 %v382, 4294901760
        %829 = vmatpush1.msra.mxu0 %v828
        %830 = vmatprep.subr.mxu0 0.0
        %831 = vmatpush2.msra.mxu0 0.0
        %832 = vmatprep.subr.mxu0 0.0
        %833 = vmatpush2.msra.mxu0 0.0
        %834 = vmatprep.subr.mxu0 0.0
        %835 = vmatpush2.msra.mxu0 0.0
        %836 = vmatprep.subr.mxu0 0.0
        %837 = vmatpush2.msra.mxu0 0.0
        %838 = vmatprep.subr.mxu0 0.0
        %839 = vmatpush2.msra.mxu0 0.0
        %840 = vmatprep.subr.mxu0 0.0
        %841 = vmatpush2.msra.mxu0 0.0
        %842 = vmatprep.subr.mxu0 0.0
        %843 = vmatpush2.msra.mxu0 0.0
        %844 = vmatprep.subr.mxu0 0.0
        %845 = vmatpush2.msra.mxu0 0.0
        %846 = vmatprep.subr.mxu0 0.0
        %847 = vmatpush2.msra.mxu0 0.0
        %848 = vmatprep.subr.mxu0 0.0
        %849 = vmatpush2.msra.mxu0 0.0
        %850 = vmatprep.subr.mxu0 0.0
        %851 = vmatpush2.msra.mxu0 0.0
        %852 = vmatprep.subr.mxu0 0.0
        %853 = vmatpush2.msra.mxu0 0.0
        %854 = vmatprep.subr.mxu0 0.0
        %855 = vmatpush2.msra.mxu0 0.0
        %856 = vmatprep.subr.mxu0 0.0
        %857 = vmatpush2.msra.mxu0 0.0
        %858 = vmatprep.subr.mxu0 0.0
        %859 = vmatpush2.msra.mxu0 0.0
        %860 = vmatprep.subr.mxu0 0.0
        %861 = vmatpush2.msra.mxu0 0.0
        %862 = vmatprep.mubr.f32.mxu0 0.0
        %v863 = vand.u32 %v395, 4294901760
        %864 = vmatmul.mubr.f32.gmra.mxu0 %v863
        %v865 = vpop.f32.mrf.mxu0
        %v866 = vadd.f32 %v792, %v865
        %v867 = vpop.f32.mrf.mxu0
        %868 = vdwg.mxu0
        %v869 = vld [vmem:[%s378] sm:$0xff]
        %v870 = vld [vmem:[%s6] sm:$0xff]
        %871 = vset.pattern.permute.xlu0 0
        %872 = vperm.xlu0 %871, %v869
        %v873 = vpop.permute.xlu0 %872
        %vm874 = vcmp.eq.s32.totalorder %v873, %v386
        %v875 = vsel %vm874, 1, 0
        %v876 = vcvt.s32.f32 %v875
        %vm877 = vcmask 64512
        %v879 = vsel %vm877, %v876, 0
        %881 = vmatprep.subr.mxu0 0.0
        %882 = vmatpush1.msra.mxu0 0.0
        %883 = vmatprep.subr.mxu0 0.0
        %884 = vmatpush1.msra.mxu0 0.0
        %885 = vmatprep.subr.mxu0 0.0
        %886 = vmatpush1.msra.mxu0 0.0
        %887 = vmatprep.subr.mxu0 0.0
        %888 = vmatpush1.msra.mxu0 0.0
        %889 = vmatprep.subr.mxu0 0.0
        %890 = vmatpush1.msra.mxu0 0.0
        %891 = vmatprep.subr.mxu0 0.0
        %892 = vmatpush1.msra.mxu0 0.0
        %893 = vmatprep.subr.mxu0 0.0
        %894 = vmatpush1.msra.mxu0 0.0
        %895 = vmatprep.subr.mxu0 0.0
        %896 = vmatpush1.msra.mxu0 0.0
        %897 = vmatprep.subr.mxu0 0.0
        %898 = vmatpush1.msra.mxu0 0.0
        %899 = vmatprep.subr.mxu0 0.0
        %900 = vmatpush1.msra.mxu0 0.0
        %901 = vmatprep.subr.mxu0 0.0
        %902 = vmatpush1.msra.mxu0 0.0
        %903 = vmatprep.subr.mxu0 0.0
        %904 = vmatpush1.msra.mxu0 0.0
        %905 = vmatprep.subr.mxu0 0.0
        %906 = vmatpush1.msra.mxu0 0.0
        %907 = vmatprep.subr.mxu0 0.0
        %908 = vmatpush1.msra.mxu0 0.0
        %909 = vmatprep.subr.mxu0 0.0
        %910 = vmatpush1.msra.mxu0 0.0
        %911 = vmatprep.subr.mxu0 0.0
        %v912 = vand.u32 %v870, 4294901760
        %913 = vmatpush1.msra.mxu0 %v912
        %914 = vmatprep.subr.mxu0 0.0
        %915 = vmatpush2.msra.mxu0 0.0
        %916 = vmatprep.subr.mxu0 0.0
        %917 = vmatpush2.msra.mxu0 0.0
        %918 = vmatprep.subr.mxu0 0.0
        %919 = vmatpush2.msra.mxu0 0.0
        %920 = vmatprep.subr.mxu0 0.0
        %921 = vmatpush2.msra.mxu0 0.0
        %922 = vmatprep.subr.mxu0 0.0
        %923 = vmatpush2.msra.mxu0 0.0
        %924 = vmatprep.subr.mxu0 0.0
        %925 = vmatpush2.msra.mxu0 0.0
        %926 = vmatprep.subr.mxu0 0.0
        %927 = vmatpush2.msra.mxu0 0.0
        %928 = vmatprep.subr.mxu0 0.0
        %929 = vmatpush2.msra.mxu0 0.0
        %930 = vmatprep.subr.mxu0 0.0
        %931 = vmatpush2.msra.mxu0 0.0
        %932 = vmatprep.subr.mxu0 0.0
        %933 = vmatpush2.msra.mxu0 0.0
        %934 = vmatprep.subr.mxu0 0.0
        %935 = vmatpush2.msra.mxu0 0.0
        %936 = vmatprep.subr.mxu0 0.0
        %937 = vmatpush2.msra.mxu0 0.0
        %938 = vmatprep.subr.mxu0 0.0
        %939 = vmatpush2.msra.mxu0 0.0
        %940 = vmatprep.subr.mxu0 0.0
        %941 = vmatpush2.msra.mxu0 0.0
        %942 = vmatprep.subr.mxu0 0.0
        %943 = vmatpush2.msra.mxu0 0.0
        %944 = vmatprep.subr.mxu0 0.0
        %945 = vmatpush2.msra.mxu0 0.0
        %946 = vmatprep.mubr.f32.mxu0 0.0
        %v947 = vand.u32 %v879, 4294901760
        %v948 = vsub.f32 %v879, %v947
        %v949 = vand.u32 %v948, 4294901760
        %v950 = vsub.f32 %v948, %v949
        %v951 = vand.u32 %v950, 4294901760
        %952 = vmatmul.mubr.f32.gmra.mxu0 %v951
        %v953 = vpop.f32.mrf.mxu0
        %v954 = vadd.f32 0.0, %v953
        %v955 = vpop.f32.mrf.mxu0
        %956 = vdwg.mxu0
        %957 = vmatprep.subr.mxu0 0.0
        %958 = vmatpush1.msra.mxu0 0.0
        %959 = vmatprep.subr.mxu0 0.0
        %960 = vmatpush1.msra.mxu0 0.0
        %961 = vmatprep.subr.mxu0 0.0
        %962 = vmatpush1.msra.mxu0 0.0
        %963 = vmatprep.subr.mxu0 0.0
        %964 = vmatpush1.msra.mxu0 0.0
        %965 = vmatprep.subr.mxu0 0.0
        %966 = vmatpush1.msra.mxu0 0.0
        %967 = vmatprep.subr.mxu0 0.0
        %968 = vmatpush1.msra.mxu0 0.0
        %969 = vmatprep.subr.mxu0 0.0
        %970 = vmatpush1.msra.mxu0 0.0
        %971 = vmatprep.subr.mxu0 0.0
        %972 = vmatpush1.msra.mxu0 0.0
        %973 = vmatprep.subr.mxu0 0.0
        %974 = vmatpush1.msra.mxu0 0.0
        %975 = vmatprep.subr.mxu0 0.0
        %976 = vmatpush1.msra.mxu0 0.0
        %977 = vmatprep.subr.mxu0 0.0
        %978 = vmatpush1.msra.mxu0 0.0
        %979 = vmatprep.subr.mxu0 0.0
        %980 = vmatpush1.msra.mxu0 0.0
        %981 = vmatprep.subr.mxu0 0.0
        %982 = vmatpush1.msra.mxu0 0.0
        %983 = vmatprep.subr.mxu0 0.0
        %984 = vmatpush1.msra.mxu0 0.0
        %985 = vmatprep.subr.mxu0 0.0
        %986 = vmatpush1.msra.mxu0 0.0
        %987 = vmatprep.subr.mxu0 0.0
        %v988 = vand.u32 %v870, 4294901760
        %v989 = vsub.f32 %v870, %v988
        %v990 = vand.u32 %v989, 4294901760
        %v991 = vsub.f32 %v989, %v990
        %v992 = vand.u32 %v991, 4294901760
        %993 = vmatpush1.msra.mxu0 %v992
        %994 = vmatprep.subr.mxu0 0.0
        %995 = vmatpush2.msra.mxu0 0.0
        %996 = vmatprep.subr.mxu0 0.0
        %997 = vmatpush2.msra.mxu0 0.0
        %998 = vmatprep.subr.mxu0 0.0
        %999 = vmatpush2.msra.mxu0 0.0
        %1000 = vmatprep.subr.mxu0 0.0
        %1001 = vmatpush2.msra.mxu0 0.0
        %1002 = vmatprep.subr.mxu0 0.0
        %1003 = vmatpush2.msra.mxu0 0.0
        %1004 = vmatprep.subr.mxu0 0.0
        %1005 = vmatpush2.msra.mxu0 0.0
        %1006 = vmatprep.subr.mxu0 0.0
        %1007 = vmatpush2.msra.mxu0 0.0
        %1008 = vmatprep.subr.mxu0 0.0
        %1009 = vmatpush2.msra.mxu0 0.0
        %1010 = vmatprep.subr.mxu0 0.0
        %1011 = vmatpush2.msra.mxu0 0.0
        %1012 = vmatprep.subr.mxu0 0.0
        %1013 = vmatpush2.msra.mxu0 0.0
        %1014 = vmatprep.subr.mxu0 0.0
        %1015 = vmatpush2.msra.mxu0 0.0
        %1016 = vmatprep.subr.mxu0 0.0
        %1017 = vmatpush2.msra.mxu0 0.0
        %1018 = vmatprep.subr.mxu0 0.0
        %1019 = vmatpush2.msra.mxu0 0.0
        %1020 = vmatprep.subr.mxu0 0.0
        %1021 = vmatpush2.msra.mxu0 0.0
        %1022 = vmatprep.subr.mxu0 0.0
        %1023 = vmatpush2.msra.mxu0 0.0
        %1024 = vmatprep.subr.mxu0 0.0
        %1025 = vmatpush2.msra.mxu0 0.0
        %1026 = vmatprep.mubr.f32.mxu0 0.0
        %v1027 = vand.u32 %v879, 4294901760
        %1028 = vmatmul.mubr.f32.gmra.mxu0 %v1027
        %v1029 = vpop.f32.mrf.mxu0
        %v1030 = vadd.f32 %v954, %v1029
        %v1031 = vpop.f32.mrf.mxu0
        %1032 = vdwg.mxu0
        %1033 = vmatprep.subr.mxu0 0.0
        %1034 = vmatpush1.msra.mxu0 0.0
        %1035 = vmatprep.subr.mxu0 0.0
        %1036 = vmatpush1.msra.mxu0 0.0
        %1037 = vmatprep.subr.mxu0 0.0
        %1038 = vmatpush1.msra.mxu0 0.0
        %1039 = vmatprep.subr.mxu0 0.0
        %1040 = vmatpush1.msra.mxu0 0.0
        %1041 = vmatprep.subr.mxu0 0.0
        %1042 = vmatpush1.msra.mxu0 0.0
        %1043 = vmatprep.subr.mxu0 0.0
        %1044 = vmatpush1.msra.mxu0 0.0
        %1045 = vmatprep.subr.mxu0 0.0
        %1046 = vmatpush1.msra.mxu0 0.0
        %1047 = vmatprep.subr.mxu0 0.0
        %1048 = vmatpush1.msra.mxu0 0.0
        %1049 = vmatprep.subr.mxu0 0.0
        %1050 = vmatpush1.msra.mxu0 0.0
        %1051 = vmatprep.subr.mxu0 0.0
        %1052 = vmatpush1.msra.mxu0 0.0
        %1053 = vmatprep.subr.mxu0 0.0
        %1054 = vmatpush1.msra.mxu0 0.0
        %1055 = vmatprep.subr.mxu0 0.0
        %1056 = vmatpush1.msra.mxu0 0.0
        %1057 = vmatprep.subr.mxu0 0.0
        %1058 = vmatpush1.msra.mxu0 0.0
        %1059 = vmatprep.subr.mxu0 0.0
        %1060 = vmatpush1.msra.mxu0 0.0
        %1061 = vmatprep.subr.mxu0 0.0
        %1062 = vmatpush1.msra.mxu0 0.0
        %1063 = vmatprep.subr.mxu0 0.0
        %v1064 = vand.u32 %v870, 4294901760
        %v1065 = vsub.f32 %v870, %v1064
        %1066 = vmatpush1.msra.mxu0 %v1065
        %1067 = vmatprep.subr.mxu0 0.0
        %1068 = vmatpush2.msra.mxu0 0.0
        %1069 = vmatprep.subr.mxu0 0.0
        %1070 = vmatpush2.msra.mxu0 0.0
        %1071 = vmatprep.subr.mxu0 0.0
        %1072 = vmatpush2.msra.mxu0 0.0
        %1073 = vmatprep.subr.mxu0 0.0
        %1074 = vmatpush2.msra.mxu0 0.0
        %1075 = vmatprep.subr.mxu0 0.0
        %1076 = vmatpush2.msra.mxu0 0.0
        %1077 = vmatprep.subr.mxu0 0.0
        %1078 = vmatpush2.msra.mxu0 0.0
        %1079 = vmatprep.subr.mxu0 0.0
        %1080 = vmatpush2.msra.mxu0 0.0
        %1081 = vmatprep.subr.mxu0 0.0
        %1082 = vmatpush2.msra.mxu0 0.0
        %1083 = vmatprep.subr.mxu0 0.0
        %1084 = vmatpush2.msra.mxu0 0.0
        %1085 = vmatprep.subr.mxu0 0.0
        %1086 = vmatpush2.msra.mxu0 0.0
        %1087 = vmatprep.subr.mxu0 0.0
        %1088 = vmatpush2.msra.mxu0 0.0
        %1089 = vmatprep.subr.mxu0 0.0
        %1090 = vmatpush2.msra.mxu0 0.0
        %1091 = vmatprep.subr.mxu0 0.0
        %1092 = vmatpush2.msra.mxu0 0.0
        %1093 = vmatprep.subr.mxu0 0.0
        %1094 = vmatpush2.msra.mxu0 0.0
        %1095 = vmatprep.subr.mxu0 0.0
        %1096 = vmatpush2.msra.mxu0 0.0
        %1097 = vmatprep.subr.mxu0 0.0
        %1098 = vmatpush2.msra.mxu0 0.0
        %1099 = vmatprep.mubr.f32.mxu0 0.0
        %v1100 = vand.u32 %v879, 4294901760
        %v1101 = vsub.f32 %v879, %v1100
        %1102 = vmatmul.mubr.f32.gmra.mxu0 %v1101
        %v1103 = vpop.f32.mrf.mxu0
        %v1104 = vadd.f32 %v1030, %v1103
        %v1105 = vpop.f32.mrf.mxu0
        %1106 = vdwg.mxu0
        %1107 = vmatprep.subr.mxu0 0.0
        %1108 = vmatpush1.msra.mxu0 0.0
        %1109 = vmatprep.subr.mxu0 0.0
        %1110 = vmatpush1.msra.mxu0 0.0
        %1111 = vmatprep.subr.mxu0 0.0
        %1112 = vmatpush1.msra.mxu0 0.0
        %1113 = vmatprep.subr.mxu0 0.0
        %1114 = vmatpush1.msra.mxu0 0.0
        %1115 = vmatprep.subr.mxu0 0.0
        %1116 = vmatpush1.msra.mxu0 0.0
        %1117 = vmatprep.subr.mxu0 0.0
        %1118 = vmatpush1.msra.mxu0 0.0
        %1119 = vmatprep.subr.mxu0 0.0
        %1120 = vmatpush1.msra.mxu0 0.0
        %1121 = vmatprep.subr.mxu0 0.0
        %1122 = vmatpush1.msra.mxu0 0.0
        %1123 = vmatprep.subr.mxu0 0.0
        %1124 = vmatpush1.msra.mxu0 0.0
        %1125 = vmatprep.subr.mxu0 0.0
        %1126 = vmatpush1.msra.mxu0 0.0
        %1127 = vmatprep.subr.mxu0 0.0
        %1128 = vmatpush1.msra.mxu0 0.0
        %1129 = vmatprep.subr.mxu0 0.0
        %1130 = vmatpush1.msra.mxu0 0.0
        %1131 = vmatprep.subr.mxu0 0.0
        %1132 = vmatpush1.msra.mxu0 0.0
        %1133 = vmatprep.subr.mxu0 0.0
        %1134 = vmatpush1.msra.mxu0 0.0
        %1135 = vmatprep.subr.mxu0 0.0
        %1136 = vmatpush1.msra.mxu0 0.0
        %1137 = vmatprep.subr.mxu0 0.0
        %v1138 = vand.u32 %v870, 4294901760
        %1139 = vmatpush1.msra.mxu0 %v1138
        %1140 = vmatprep.subr.mxu0 0.0
        %1141 = vmatpush2.msra.mxu0 0.0
        %1142 = vmatprep.subr.mxu0 0.0
        %1143 = vmatpush2.msra.mxu0 0.0
        %1144 = vmatprep.subr.mxu0 0.0
        %1145 = vmatpush2.msra.mxu0 0.0
        %1146 = vmatprep.subr.mxu0 0.0
        %1147 = vmatpush2.msra.mxu0 0.0
        %1148 = vmatprep.subr.mxu0 0.0
        %1149 = vmatpush2.msra.mxu0 0.0
        %1150 = vmatprep.subr.mxu0 0.0
        %1151 = vmatpush2.msra.mxu0 0.0
        %1152 = vmatprep.subr.mxu0 0.0
        %1153 = vmatpush2.msra.mxu0 0.0
        %1154 = vmatprep.subr.mxu0 0.0
        %1155 = vmatpush2.msra.mxu0 0.0
        %1156 = vmatprep.subr.mxu0 0.0
        %1157 = vmatpush2.msra.mxu0 0.0
        %1158 = vmatprep.subr.mxu0 0.0
        %1159 = vmatpush2.msra.mxu0 0.0
        %1160 = vmatprep.subr.mxu0 0.0
        %1161 = vmatpush2.msra.mxu0 0.0
        %1162 = vmatprep.subr.mxu0 0.0
        %1163 = vmatpush2.msra.mxu0 0.0
        %1164 = vmatprep.subr.mxu0 0.0
        %1165 = vmatpush2.msra.mxu0 0.0
        %1166 = vmatprep.subr.mxu0 0.0
        %1167 = vmatpush2.msra.mxu0 0.0
        %1168 = vmatprep.subr.mxu0 0.0
        %1169 = vmatpush2.msra.mxu0 0.0
        %1170 = vmatprep.subr.mxu0 0.0
        %1171 = vmatpush2.msra.mxu0 0.0
        %1172 = vmatprep.mubr.f32.mxu0 0.0
        %v1173 = vand.u32 %v879, 4294901760
        %v1174 = vsub.f32 %v879, %v1173
        %v1175 = vand.u32 %v1174, 4294901760
        %1176 = vmatmul.mubr.f32.gmra.mxu0 %v1175
        %v1177 = vpop.f32.mrf.mxu0
        %v1178 = vadd.f32 %v1104, %v1177
        %v1179 = vpop.f32.mrf.mxu0
        %1180 = vdwg.mxu0
        %1181 = vmatprep.subr.mxu0 0.0
        %1182 = vmatpush1.msra.mxu0 0.0
        %1183 = vmatprep.subr.mxu0 0.0
        %1184 = vmatpush1.msra.mxu0 0.0
        %1185 = vmatprep.subr.mxu0 0.0
        %1186 = vmatpush1.msra.mxu0 0.0
        %1187 = vmatprep.subr.mxu0 0.0
        %1188 = vmatpush1.msra.mxu0 0.0
        %1189 = vmatprep.subr.mxu0 0.0
        %1190 = vmatpush1.msra.mxu0 0.0
        %1191 = vmatprep.subr.mxu0 0.0
        %1192 = vmatpush1.msra.mxu0 0.0
        %1193 = vmatprep.subr.mxu0 0.0
        %1194 = vmatpush1.msra.mxu0 0.0
        %1195 = vmatprep.subr.mxu0 0.0
        %1196 = vmatpush1.msra.mxu0 0.0
        %1197 = vmatprep.subr.mxu0 0.0
        %1198 = vmatpush1.msra.mxu0 0.0
        %1199 = vmatprep.subr.mxu0 0.0
        %1200 = vmatpush1.msra.mxu0 0.0
        %1201 = vmatprep.subr.mxu0 0.0
        %1202 = vmatpush1.msra.mxu0 0.0
        %1203 = vmatprep.subr.mxu0 0.0
        %1204 = vmatpush1.msra.mxu0 0.0
        %1205 = vmatprep.subr.mxu0 0.0
        %1206 = vmatpush1.msra.mxu0 0.0
        %1207 = vmatprep.subr.mxu0 0.0
        %1208 = vmatpush1.msra.mxu0 0.0
        %1209 = vmatprep.subr.mxu0 0.0
        %1210 = vmatpush1.msra.mxu0 0.0
        %1211 = vmatprep.subr.mxu0 0.0
        %v1212 = vand.u32 %v870, 4294901760
        %v1213 = vsub.f32 %v870, %v1212
        %v1214 = vand.u32 %v1213, 4294901760
        %1215 = vmatpush1.msra.mxu0 %v1214
        %1216 = vmatprep.subr.mxu0 0.0
        %1217 = vmatpush2.msra.mxu0 0.0
        %1218 = vmatprep.subr.mxu0 0.0
        %1219 = vmatpush2.msra.mxu0 0.0
        %1220 = vmatprep.subr.mxu0 0.0
        %1221 = vmatpush2.msra.mxu0 0.0
        %1222 = vmatprep.subr.mxu0 0.0
        %1223 = vmatpush2.msra.mxu0 0.0
        %1224 = vmatprep.subr.mxu0 0.0
        %1225 = vmatpush2.msra.mxu0 0.0
        %1226 = vmatprep.subr.mxu0 0.0
        %1227 = vmatpush2.msra.mxu0 0.0
        %1228 = vmatprep.subr.mxu0 0.0
        %1229 = vmatpush2.msra.mxu0 0.0
        %1230 = vmatprep.subr.mxu0 0.0
        %1231 = vmatpush2.msra.mxu0 0.0
        %1232 = vmatprep.subr.mxu0 0.0
        %1233 = vmatpush2.msra.mxu0 0.0
        %1234 = vmatprep.subr.mxu0 0.0
        %1235 = vmatpush2.msra.mxu0 0.0
        %1236 = vmatprep.subr.mxu0 0.0
        %1237 = vmatpush2.msra.mxu0 0.0
        %1238 = vmatprep.subr.mxu0 0.0
        %1239 = vmatpush2.msra.mxu0 0.0
        %1240 = vmatprep.subr.mxu0 0.0
        %1241 = vmatpush2.msra.mxu0 0.0
        %1242 = vmatprep.subr.mxu0 0.0
        %1243 = vmatpush2.msra.mxu0 0.0
        %1244 = vmatprep.subr.mxu0 0.0
        %1245 = vmatpush2.msra.mxu0 0.0
        %1246 = vmatprep.subr.mxu0 0.0
        %1247 = vmatpush2.msra.mxu0 0.0
        %1248 = vmatprep.mubr.f32.mxu0 0.0
        %v1249 = vand.u32 %v879, 4294901760
        %1250 = vmatmul.mubr.f32.gmra.mxu0 %v1249
        %v1251 = vpop.f32.mrf.mxu0
        %v1252 = vadd.f32 %v1178, %v1251
        %v1253 = vpop.f32.mrf.mxu0
        %1254 = vdwg.mxu0
        %1255 = vmatprep.subr.mxu0 0.0
        %1256 = vmatpush1.msra.mxu0 0.0
        %1257 = vmatprep.subr.mxu0 0.0
        %1258 = vmatpush1.msra.mxu0 0.0
        %1259 = vmatprep.subr.mxu0 0.0
        %1260 = vmatpush1.msra.mxu0 0.0
        %1261 = vmatprep.subr.mxu0 0.0
        %1262 = vmatpush1.msra.mxu0 0.0
        %1263 = vmatprep.subr.mxu0 0.0
        %1264 = vmatpush1.msra.mxu0 0.0
        %1265 = vmatprep.subr.mxu0 0.0
        %1266 = vmatpush1.msra.mxu0 0.0
        %1267 = vmatprep.subr.mxu0 0.0
        %1268 = vmatpush1.msra.mxu0 0.0
        %1269 = vmatprep.subr.mxu0 0.0
        %1270 = vmatpush1.msra.mxu0 0.0
        %1271 = vmatprep.subr.mxu0 0.0
        %1272 = vmatpush1.msra.mxu0 0.0
        %1273 = vmatprep.subr.mxu0 0.0
        %1274 = vmatpush1.msra.mxu0 0.0
        %1275 = vmatprep.subr.mxu0 0.0
        %1276 = vmatpush1.msra.mxu0 0.0
        %1277 = vmatprep.subr.mxu0 0.0
        %1278 = vmatpush1.msra.mxu0 0.0
        %1279 = vmatprep.subr.mxu0 0.0
        %1280 = vmatpush1.msra.mxu0 0.0
        %1281 = vmatprep.subr.mxu0 0.0
        %1282 = vmatpush1.msra.mxu0 0.0
        %1283 = vmatprep.subr.mxu0 0.0
        %1284 = vmatpush1.msra.mxu0 0.0
        %1285 = vmatprep.subr.mxu0 0.0
        %v1286 = vand.u32 %v870, 4294901760
        %1287 = vmatpush1.msra.mxu0 %v1286
        %1288 = vmatprep.subr.mxu0 0.0
        %1289 = vmatpush2.msra.mxu0 0.0
        %1290 = vmatprep.subr.mxu0 0.0
        %1291 = vmatpush2.msra.mxu0 0.0
        %1292 = vmatprep.subr.mxu0 0.0
        %1293 = vmatpush2.msra.mxu0 0.0
        %1294 = vmatprep.subr.mxu0 0.0
        %1295 = vmatpush2.msra.mxu0 0.0
        %1296 = vmatprep.subr.mxu0 0.0
        %1297 = vmatpush2.msra.mxu0 0.0
        %1298 = vmatprep.subr.mxu0 0.0
        %1299 = vmatpush2.msra.mxu0 0.0
        %1300 = vmatprep.subr.mxu0 0.0
        %1301 = vmatpush2.msra.mxu0 0.0
        %1302 = vmatprep.subr.mxu0 0.0
        %1303 = vmatpush2.msra.mxu0 0.0
        %1304 = vmatprep.subr.mxu0 0.0
        %1305 = vmatpush2.msra.mxu0 0.0
        %1306 = vmatprep.subr.mxu0 0.0
        %1307 = vmatpush2.msra.mxu0 0.0
        %1308 = vmatprep.subr.mxu0 0.0
        %1309 = vmatpush2.msra.mxu0 0.0
        %1310 = vmatprep.subr.mxu0 0.0
        %1311 = vmatpush2.msra.mxu0 0.0
        %1312 = vmatprep.subr.mxu0 0.0
        %1313 = vmatpush2.msra.mxu0 0.0
        %1314 = vmatprep.subr.mxu0 0.0
        %1315 = vmatpush2.msra.mxu0 0.0
        %1316 = vmatprep.subr.mxu0 0.0
        %1317 = vmatpush2.msra.mxu0 0.0
        %1318 = vmatprep.subr.mxu0 0.0
        %1319 = vmatpush2.msra.mxu0 0.0
        %1320 = vmatprep.mubr.f32.mxu0 0.0
        %v1321 = vand.u32 %v879, 4294901760
        %1322 = vmatmul.mubr.f32.gmra.mxu0 %v1321
        %v1323 = vpop.f32.mrf.mxu0
        %v1324 = vadd.f32 %v1252, %v1323
        %v1325 = vpop.f32.mrf.mxu0
        %1326 = vdwg.mxu0
        %v1327 = vld [vmem:[%s370] sm:$0xff]
        %v1328 = vld [vmem:[%s5] sm:$0xff]
        %1329 = vset.pattern.permute.xlu0 0
        %1330 = vperm.xlu0 %1329, %v1327
        %v1331 = vpop.permute.xlu0 %1330
        %vm1332 = vcmp.eq.s32.totalorder %v1331, %v386
        %v1333 = vsel %vm1332, 1, 0
        %v1334 = vcvt.s32.f32 %v1333
        %v1335 = vld [vmem:[%s374] sm:$0xff]
        %1336 = vset.pattern.permute.xlu0 0
        %1337 = vperm.xlu0 %1336, %v1335
        %v1338 = vpop.permute.xlu0 %1337
        %vm1339 = vcmp.eq.s32.totalorder %v1338, %v386
        %v1340 = vsel %vm1339, 1, 0
        %v1341 = vcvt.s32.f32 %v1340
        %v1343 = vsel %vm877, %v1341, 0
        %1345 = vmatprep.subr.mxu0 0.0
        %1346 = vmatpush1.msra.mxu0 0.0
        %1347 = vmatprep.subr.mxu0 0.0
        %1348 = vmatpush1.msra.mxu0 0.0
        %1349 = vmatprep.subr.mxu0 0.0
        %1350 = vmatpush1.msra.mxu0 0.0
        %1351 = vmatprep.subr.mxu0 0.0
        %1352 = vmatpush1.msra.mxu0 0.0
        %1353 = vmatprep.subr.mxu0 0.0
        %1354 = vmatpush1.msra.mxu0 0.0
        %1355 = vmatprep.subr.mxu0 0.0
        %1356 = vmatpush1.msra.mxu0 0.0
        %1357 = vmatprep.subr.mxu0 0.0
        %1358 = vmatpush1.msra.mxu0 0.0
        %1359 = vmatprep.subr.mxu0 0.0
        %1360 = vmatpush1.msra.mxu0 0.0
        %1361 = vmatprep.subr.mxu0 0.0
        %1362 = vmatpush1.msra.mxu0 0.0
        %1363 = vmatprep.subr.mxu0 0.0
        %1364 = vmatpush1.msra.mxu0 0.0
        %1365 = vmatprep.subr.mxu0 0.0
        %1366 = vmatpush1.msra.mxu0 0.0
        %1367 = vmatprep.subr.mxu0 0.0
        %1368 = vmatpush1.msra.mxu0 0.0
        %1369 = vmatprep.subr.mxu0 0.0
        %1370 = vmatpush1.msra.mxu0 0.0
        %1371 = vmatprep.subr.mxu0 0.0
        %1372 = vmatpush1.msra.mxu0 0.0
        %1373 = vmatprep.subr.mxu0 0.0
        %1374 = vmatpush1.msra.mxu0 0.0
        %1375 = vmatprep.subr.mxu0 0.0
        %v1376 = vand.u32 %v1328, 4294901760
        %1377 = vmatpush1.msra.mxu0 %v1376
        %1378 = vmatprep.subr.mxu0 0.0
        %1379 = vmatpush2.msra.mxu0 0.0
        %1380 = vmatprep.subr.mxu0 0.0
        %1381 = vmatpush2.msra.mxu0 0.0
        %1382 = vmatprep.subr.mxu0 0.0
        %1383 = vmatpush2.msra.mxu0 0.0
        %1384 = vmatprep.subr.mxu0 0.0
        %1385 = vmatpush2.msra.mxu0 0.0
        %1386 = vmatprep.subr.mxu0 0.0
        %1387 = vmatpush2.msra.mxu0 0.0
        %1388 = vmatprep.subr.mxu0 0.0
        %1389 = vmatpush2.msra.mxu0 0.0
        %1390 = vmatprep.subr.mxu0 0.0
        %1391 = vmatpush2.msra.mxu0 0.0
        %1392 = vmatprep.subr.mxu0 0.0
        %1393 = vmatpush2.msra.mxu0 0.0
        %1394 = vmatprep.subr.mxu0 0.0
        %1395 = vmatpush2.msra.mxu0 0.0
        %1396 = vmatprep.subr.mxu0 0.0
        %1397 = vmatpush2.msra.mxu0 0.0
        %1398 = vmatprep.subr.mxu0 0.0
        %1399 = vmatpush2.msra.mxu0 0.0
        %1400 = vmatprep.subr.mxu0 0.0
        %1401 = vmatpush2.msra.mxu0 0.0
        %1402 = vmatprep.subr.mxu0 0.0
        %1403 = vmatpush2.msra.mxu0 0.0
        %1404 = vmatprep.subr.mxu0 0.0
        %1405 = vmatpush2.msra.mxu0 0.0
        %1406 = vmatprep.subr.mxu0 0.0
        %1407 = vmatpush2.msra.mxu0 0.0
        %1408 = vmatprep.subr.mxu0 0.0
        %1409 = vmatpush2.msra.mxu0 0.0
        %1410 = vmatprep.mubr.f32.mxu0 0.0
        %v1411 = vand.u32 %v1343, 4294901760
        %v1412 = vsub.f32 %v1343, %v1411
        %v1413 = vand.u32 %v1412, 4294901760
        %v1414 = vsub.f32 %v1412, %v1413
        %v1415 = vand.u32 %v1414, 4294901760
        %1416 = vmatmul.mubr.f32.gmra.mxu0 %v1415
        %v1417 = vpop.f32.mrf.mxu0
        %v1418 = vadd.f32 0.0, %v1417
        %v1419 = vpop.f32.mrf.mxu0
        %1420 = vdwg.mxu0
        %1421 = vmatprep.subr.mxu0 0.0
        %1422 = vmatpush1.msra.mxu0 0.0
        %1423 = vmatprep.subr.mxu0 0.0
        %1424 = vmatpush1.msra.mxu0 0.0
        %1425 = vmatprep.subr.mxu0 0.0
        %1426 = vmatpush1.msra.mxu0 0.0
        %1427 = vmatprep.subr.mxu0 0.0
        %1428 = vmatpush1.msra.mxu0 0.0
        %1429 = vmatprep.subr.mxu0 0.0
        %1430 = vmatpush1.msra.mxu0 0.0
        %1431 = vmatprep.subr.mxu0 0.0
        %1432 = vmatpush1.msra.mxu0 0.0
        %1433 = vmatprep.subr.mxu0 0.0
        %1434 = vmatpush1.msra.mxu0 0.0
        %1435 = vmatprep.subr.mxu0 0.0
        %1436 = vmatpush1.msra.mxu0 0.0
        %1437 = vmatprep.subr.mxu0 0.0
        %1438 = vmatpush1.msra.mxu0 0.0
        %1439 = vmatprep.subr.mxu0 0.0
        %1440 = vmatpush1.msra.mxu0 0.0
        %1441 = vmatprep.subr.mxu0 0.0
        %1442 = vmatpush1.msra.mxu0 0.0
        %1443 = vmatprep.subr.mxu0 0.0
        %1444 = vmatpush1.msra.mxu0 0.0
        %1445 = vmatprep.subr.mxu0 0.0
        %1446 = vmatpush1.msra.mxu0 0.0
        %1447 = vmatprep.subr.mxu0 0.0
        %1448 = vmatpush1.msra.mxu0 0.0
        %1449 = vmatprep.subr.mxu0 0.0
        %1450 = vmatpush1.msra.mxu0 0.0
        %1451 = vmatprep.subr.mxu0 0.0
        %v1452 = vand.u32 %v1328, 4294901760
        %v1453 = vsub.f32 %v1328, %v1452
        %v1454 = vand.u32 %v1453, 4294901760
        %v1455 = vsub.f32 %v1453, %v1454
        %v1456 = vand.u32 %v1455, 4294901760
        %1457 = vmatpush1.msra.mxu0 %v1456
        %1458 = vmatprep.subr.mxu0 0.0
        %1459 = vmatpush2.msra.mxu0 0.0
        %1460 = vmatprep.subr.mxu0 0.0
        %1461 = vmatpush2.msra.mxu0 0.0
        %1462 = vmatprep.subr.mxu0 0.0
        %1463 = vmatpush2.msra.mxu0 0.0
        %1464 = vmatprep.subr.mxu0 0.0
        %1465 = vmatpush2.msra.mxu0 0.0
        %1466 = vmatprep.subr.mxu0 0.0
        %1467 = vmatpush2.msra.mxu0 0.0
        %1468 = vmatprep.subr.mxu0 0.0
        %1469 = vmatpush2.msra.mxu0 0.0
        %1470 = vmatprep.subr.mxu0 0.0
        %1471 = vmatpush2.msra.mxu0 0.0
        %1472 = vmatprep.subr.mxu0 0.0
        %1473 = vmatpush2.msra.mxu0 0.0
        %1474 = vmatprep.subr.mxu0 0.0
        %1475 = vmatpush2.msra.mxu0 0.0
        %1476 = vmatprep.subr.mxu0 0.0
        %1477 = vmatpush2.msra.mxu0 0.0
        %1478 = vmatprep.subr.mxu0 0.0
        %1479 = vmatpush2.msra.mxu0 0.0
        %1480 = vmatprep.subr.mxu0 0.0
        %1481 = vmatpush2.msra.mxu0 0.0
        %1482 = vmatprep.subr.mxu0 0.0
        %1483 = vmatpush2.msra.mxu0 0.0
        %1484 = vmatprep.subr.mxu0 0.0
        %1485 = vmatpush2.msra.mxu0 0.0
        %1486 = vmatprep.subr.mxu0 0.0
        %1487 = vmatpush2.msra.mxu0 0.0
        %1488 = vmatprep.subr.mxu0 0.0
        %1489 = vmatpush2.msra.mxu0 0.0
        %1490 = vmatprep.mubr.f32.mxu0 0.0
        %v1491 = vand.u32 %v1343, 4294901760
        %1492 = vmatmul.mubr.f32.gmra.mxu0 %v1491
        %v1493 = vpop.f32.mrf.mxu0
        %v1494 = vadd.f32 %v1418, %v1493
        %v1495 = vpop.f32.mrf.mxu0
        %1496 = vdwg.mxu0
        %1497 = vmatprep.subr.mxu0 0.0
        %1498 = vmatpush1.msra.mxu0 0.0
        %1499 = vmatprep.subr.mxu0 0.0
        %1500 = vmatpush1.msra.mxu0 0.0
        %1501 = vmatprep.subr.mxu0 0.0
        %1502 = vmatpush1.msra.mxu0 0.0
        %1503 = vmatprep.subr.mxu0 0.0
        %1504 = vmatpush1.msra.mxu0 0.0
        %1505 = vmatprep.subr.mxu0 0.0
        %1506 = vmatpush1.msra.mxu0 0.0
        %1507 = vmatprep.subr.mxu0 0.0
        %1508 = vmatpush1.msra.mxu0 0.0
        %1509 = vmatprep.subr.mxu0 0.0
        %1510 = vmatpush1.msra.mxu0 0.0
        %1511 = vmatprep.subr.mxu0 0.0
        %1512 = vmatpush1.msra.mxu0 0.0
        %1513 = vmatprep.subr.mxu0 0.0
        %1514 = vmatpush1.msra.mxu0 0.0
        %1515 = vmatprep.subr.mxu0 0.0
        %1516 = vmatpush1.msra.mxu0 0.0
        %1517 = vmatprep.subr.mxu0 0.0
        %1518 = vmatpush1.msra.mxu0 0.0
        %1519 = vmatprep.subr.mxu0 0.0
        %1520 = vmatpush1.msra.mxu0 0.0
        %1521 = vmatprep.subr.mxu0 0.0
        %1522 = vmatpush1.msra.mxu0 0.0
        %1523 = vmatprep.subr.mxu0 0.0
        %1524 = vmatpush1.msra.mxu0 0.0
        %1525 = vmatprep.subr.mxu0 0.0
        %1526 = vmatpush1.msra.mxu0 0.0
        %1527 = vmatprep.subr.mxu0 0.0
        %v1528 = vand.u32 %v1328, 4294901760
        %v1529 = vsub.f32 %v1328, %v1528
        %1530 = vmatpush1.msra.mxu0 %v1529
        %1531 = vmatprep.subr.mxu0 0.0
        %1532 = vmatpush2.msra.mxu0 0.0
        %1533 = vmatprep.subr.mxu0 0.0
        %1534 = vmatpush2.msra.mxu0 0.0
        %1535 = vmatprep.subr.mxu0 0.0
        %1536 = vmatpush2.msra.mxu0 0.0
        %1537 = vmatprep.subr.mxu0 0.0
        %1538 = vmatpush2.msra.mxu0 0.0
        %1539 = vmatprep.subr.mxu0 0.0
        %1540 = vmatpush2.msra.mxu0 0.0
        %1541 = vmatprep.subr.mxu0 0.0
        %1542 = vmatpush2.msra.mxu0 0.0
        %1543 = vmatprep.subr.mxu0 0.0
        %1544 = vmatpush2.msra.mxu0 0.0
        %1545 = vmatprep.subr.mxu0 0.0
        %1546 = vmatpush2.msra.mxu0 0.0
        %1547 = vmatprep.subr.mxu0 0.0
        %1548 = vmatpush2.msra.mxu0 0.0
        %1549 = vmatprep.subr.mxu0 0.0
        %1550 = vmatpush2.msra.mxu0 0.0
        %1551 = vmatprep.subr.mxu0 0.0
        %1552 = vmatpush2.msra.mxu0 0.0
        %1553 = vmatprep.subr.mxu0 0.0
        %1554 = vmatpush2.msra.mxu0 0.0
        %1555 = vmatprep.subr.mxu0 0.0
        %1556 = vmatpush2.msra.mxu0 0.0
        %1557 = vmatprep.subr.mxu0 0.0
        %1558 = vmatpush2.msra.mxu0 0.0
        %1559 = vmatprep.subr.mxu0 0.0
        %1560 = vmatpush2.msra.mxu0 0.0
        %1561 = vmatprep.subr.mxu0 0.0
        %1562 = vmatpush2.msra.mxu0 0.0
        %1563 = vmatprep.mubr.f32.mxu0 0.0
        %v1564 = vand.u32 %v1343, 4294901760
        %v1565 = vsub.f32 %v1343, %v1564
        %1566 = vmatmul.mubr.f32.gmra.mxu0 %v1565
        %v1567 = vpop.f32.mrf.mxu0
        %v1568 = vadd.f32 %v1494, %v1567
        %v1569 = vpop.f32.mrf.mxu0
        %1570 = vdwg.mxu0
        %1571 = vmatprep.subr.mxu0 0.0
        %1572 = vmatpush1.msra.mxu0 0.0
        %1573 = vmatprep.subr.mxu0 0.0
        %1574 = vmatpush1.msra.mxu0 0.0
        %1575 = vmatprep.subr.mxu0 0.0
        %1576 = vmatpush1.msra.mxu0 0.0
        %1577 = vmatprep.subr.mxu0 0.0
        %1578 = vmatpush1.msra.mxu0 0.0
        %1579 = vmatprep.subr.mxu0 0.0
        %1580 = vmatpush1.msra.mxu0 0.0
        %1581 = vmatprep.subr.mxu0 0.0
        %1582 = vmatpush1.msra.mxu0 0.0
        %1583 = vmatprep.subr.mxu0 0.0
        %1584 = vmatpush1.msra.mxu0 0.0
        %1585 = vmatprep.subr.mxu0 0.0
        %1586 = vmatpush1.msra.mxu0 0.0
        %1587 = vmatprep.subr.mxu0 0.0
        %1588 = vmatpush1.msra.mxu0 0.0
        %1589 = vmatprep.subr.mxu0 0.0
        %1590 = vmatpush1.msra.mxu0 0.0
        %1591 = vmatprep.subr.mxu0 0.0
        %1592 = vmatpush1.msra.mxu0 0.0
        %1593 = vmatprep.subr.mxu0 0.0
        %1594 = vmatpush1.msra.mxu0 0.0
        %1595 = vmatprep.subr.mxu0 0.0
        %1596 = vmatpush1.msra.mxu0 0.0
        %1597 = vmatprep.subr.mxu0 0.0
        %1598 = vmatpush1.msra.mxu0 0.0
        %1599 = vmatprep.subr.mxu0 0.0
        %1600 = vmatpush1.msra.mxu0 0.0
        %1601 = vmatprep.subr.mxu0 0.0
        %v1602 = vand.u32 %v1328, 4294901760
        %1603 = vmatpush1.msra.mxu0 %v1602
        %1604 = vmatprep.subr.mxu0 0.0
        %1605 = vmatpush2.msra.mxu0 0.0
        %1606 = vmatprep.subr.mxu0 0.0
        %1607 = vmatpush2.msra.mxu0 0.0
        %1608 = vmatprep.subr.mxu0 0.0
        %1609 = vmatpush2.msra.mxu0 0.0
        %1610 = vmatprep.subr.mxu0 0.0
        %1611 = vmatpush2.msra.mxu0 0.0
        %1612 = vmatprep.subr.mxu0 0.0
        %1613 = vmatpush2.msra.mxu0 0.0
        %1614 = vmatprep.subr.mxu0 0.0
        %1615 = vmatpush2.msra.mxu0 0.0
        %1616 = vmatprep.subr.mxu0 0.0
        %1617 = vmatpush2.msra.mxu0 0.0
        %1618 = vmatprep.subr.mxu0 0.0
        %1619 = vmatpush2.msra.mxu0 0.0
        %1620 = vmatprep.subr.mxu0 0.0
        %1621 = vmatpush2.msra.mxu0 0.0
        %1622 = vmatprep.subr.mxu0 0.0
        %1623 = vmatpush2.msra.mxu0 0.0
        %1624 = vmatprep.subr.mxu0 0.0
        %1625 = vmatpush2.msra.mxu0 0.0
        %1626 = vmatprep.subr.mxu0 0.0
        %1627 = vmatpush2.msra.mxu0 0.0
        %1628 = vmatprep.subr.mxu0 0.0
        %1629 = vmatpush2.msra.mxu0 0.0
        %1630 = vmatprep.subr.mxu0 0.0
        %1631 = vmatpush2.msra.mxu0 0.0
        %1632 = vmatprep.subr.mxu0 0.0
        %1633 = vmatpush2.msra.mxu0 0.0
        %1634 = vmatprep.subr.mxu0 0.0
        %1635 = vmatpush2.msra.mxu0 0.0
        %1636 = vmatprep.mubr.f32.mxu0 0.0
        %v1637 = vand.u32 %v1343, 4294901760
        %v1638 = vsub.f32 %v1343, %v1637
        %v1639 = vand.u32 %v1638, 4294901760
        %1640 = vmatmul.mubr.f32.gmra.mxu0 %v1639
        %v1641 = vpop.f32.mrf.mxu0
        %v1642 = vadd.f32 %v1568, %v1641
        %v1643 = vpop.f32.mrf.mxu0
        %1644 = vdwg.mxu0
        %1645 = vmatprep.subr.mxu0 0.0
        %1646 = vmatpush1.msra.mxu0 0.0
        %1647 = vmatprep.subr.mxu0 0.0
        %1648 = vmatpush1.msra.mxu0 0.0
        %1649 = vmatprep.subr.mxu0 0.0
        %1650 = vmatpush1.msra.mxu0 0.0
        %1651 = vmatprep.subr.mxu0 0.0
        %1652 = vmatpush1.msra.mxu0 0.0
        %1653 = vmatprep.subr.mxu0 0.0
        %1654 = vmatpush1.msra.mxu0 0.0
        %1655 = vmatprep.subr.mxu0 0.0
        %1656 = vmatpush1.msra.mxu0 0.0
        %1657 = vmatprep.subr.mxu0 0.0
        %1658 = vmatpush1.msra.mxu0 0.0
        %1659 = vmatprep.subr.mxu0 0.0
        %1660 = vmatpush1.msra.mxu0 0.0
        %1661 = vmatprep.subr.mxu0 0.0
        %1662 = vmatpush1.msra.mxu0 0.0
        %1663 = vmatprep.subr.mxu0 0.0
        %1664 = vmatpush1.msra.mxu0 0.0
        %1665 = vmatprep.subr.mxu0 0.0
        %1666 = vmatpush1.msra.mxu0 0.0
        %1667 = vmatprep.subr.mxu0 0.0
        %1668 = vmatpush1.msra.mxu0 0.0
        %1669 = vmatprep.subr.mxu0 0.0
        %1670 = vmatpush1.msra.mxu0 0.0
        %1671 = vmatprep.subr.mxu0 0.0
        %1672 = vmatpush1.msra.mxu0 0.0
        %1673 = vmatprep.subr.mxu0 0.0
        %1674 = vmatpush1.msra.mxu0 0.0
        %1675 = vmatprep.subr.mxu0 0.0
        %v1676 = vand.u32 %v1328, 4294901760
        %v1677 = vsub.f32 %v1328, %v1676
        %v1678 = vand.u32 %v1677, 4294901760
        %1679 = vmatpush1.msra.mxu0 %v1678
        %1680 = vmatprep.subr.mxu0 0.0
        %1681 = vmatpush2.msra.mxu0 0.0
        %1682 = vmatprep.subr.mxu0 0.0
        %1683 = vmatpush2.msra.mxu0 0.0
        %1684 = vmatprep.subr.mxu0 0.0
        %1685 = vmatpush2.msra.mxu0 0.0
        %1686 = vmatprep.subr.mxu0 0.0
        %1687 = vmatpush2.msra.mxu0 0.0
        %1688 = vmatprep.subr.mxu0 0.0
        %1689 = vmatpush2.msra.mxu0 0.0
        %1690 = vmatprep.subr.mxu0 0.0
        %1691 = vmatpush2.msra.mxu0 0.0
        %1692 = vmatprep.subr.mxu0 0.0
        %1693 = vmatpush2.msra.mxu0 0.0
        %1694 = vmatprep.subr.mxu0 0.0
        %1695 = vmatpush2.msra.mxu0 0.0
        %1696 = vmatprep.subr.mxu0 0.0
        %1697 = vmatpush2.msra.mxu0 0.0
        %1698 = vmatprep.subr.mxu0 0.0
        %1699 = vmatpush2.msra.mxu0 0.0
        %1700 = vmatprep.subr.mxu0 0.0
        %1701 = vmatpush2.msra.mxu0 0.0
        %1702 = vmatprep.subr.mxu0 0.0
        %1703 = vmatpush2.msra.mxu0 0.0
        %1704 = vmatprep.subr.mxu0 0.0
        %1705 = vmatpush2.msra.mxu0 0.0
        %1706 = vmatprep.subr.mxu0 0.0
        %1707 = vmatpush2.msra.mxu0 0.0
        %1708 = vmatprep.subr.mxu0 0.0
        %1709 = vmatpush2.msra.mxu0 0.0
        %1710 = vmatprep.subr.mxu0 0.0
        %1711 = vmatpush2.msra.mxu0 0.0
        %1712 = vmatprep.mubr.f32.mxu0 0.0
        %v1713 = vand.u32 %v1343, 4294901760
        %1714 = vmatmul.mubr.f32.gmra.mxu0 %v1713
        %v1715 = vpop.f32.mrf.mxu0
        %v1716 = vadd.f32 %v1642, %v1715
        %v1717 = vpop.f32.mrf.mxu0
        %1718 = vdwg.mxu0
        %1719 = vmatprep.subr.mxu0 0.0
        %1720 = vmatpush1.msra.mxu0 0.0
        %1721 = vmatprep.subr.mxu0 0.0
        %1722 = vmatpush1.msra.mxu0 0.0
        %1723 = vmatprep.subr.mxu0 0.0
        %1724 = vmatpush1.msra.mxu0 0.0
        %1725 = vmatprep.subr.mxu0 0.0
        %1726 = vmatpush1.msra.mxu0 0.0
        %1727 = vmatprep.subr.mxu0 0.0
        %1728 = vmatpush1.msra.mxu0 0.0
        %1729 = vmatprep.subr.mxu0 0.0
        %1730 = vmatpush1.msra.mxu0 0.0
        %1731 = vmatprep.subr.mxu0 0.0
        %1732 = vmatpush1.msra.mxu0 0.0
        %1733 = vmatprep.subr.mxu0 0.0
        %1734 = vmatpush1.msra.mxu0 0.0
        %1735 = vmatprep.subr.mxu0 0.0
        %1736 = vmatpush1.msra.mxu0 0.0
        %1737 = vmatprep.subr.mxu0 0.0
        %1738 = vmatpush1.msra.mxu0 0.0
        %1739 = vmatprep.subr.mxu0 0.0
        %1740 = vmatpush1.msra.mxu0 0.0
        %1741 = vmatprep.subr.mxu0 0.0
        %1742 = vmatpush1.msra.mxu0 0.0
        %1743 = vmatprep.subr.mxu0 0.0
        %1744 = vmatpush1.msra.mxu0 0.0
        %1745 = vmatprep.subr.mxu0 0.0
        %1746 = vmatpush1.msra.mxu0 0.0
        %1747 = vmatprep.subr.mxu0 0.0
        %1748 = vmatpush1.msra.mxu0 0.0
        %1749 = vmatprep.subr.mxu0 0.0
        %v1750 = vand.u32 %v1328, 4294901760
        %1751 = vmatpush1.msra.mxu0 %v1750
        %1752 = vmatprep.subr.mxu0 0.0
        %1753 = vmatpush2.msra.mxu0 0.0
        %1754 = vmatprep.subr.mxu0 0.0
        %1755 = vmatpush2.msra.mxu0 0.0
        %1756 = vmatprep.subr.mxu0 0.0
        %1757 = vmatpush2.msra.mxu0 0.0
        %1758 = vmatprep.subr.mxu0 0.0
        %1759 = vmatpush2.msra.mxu0 0.0
        %1760 = vmatprep.subr.mxu0 0.0
        %1761 = vmatpush2.msra.mxu0 0.0
        %1762 = vmatprep.subr.mxu0 0.0
        %1763 = vmatpush2.msra.mxu0 0.0
        %1764 = vmatprep.subr.mxu0 0.0
        %1765 = vmatpush2.msra.mxu0 0.0
        %1766 = vmatprep.subr.mxu0 0.0
        %1767 = vmatpush2.msra.mxu0 0.0
        %1768 = vmatprep.subr.mxu0 0.0
        %1769 = vmatpush2.msra.mxu0 0.0
        %1770 = vmatprep.subr.mxu0 0.0
        %1771 = vmatpush2.msra.mxu0 0.0
        %1772 = vmatprep.subr.mxu0 0.0
        %1773 = vmatpush2.msra.mxu0 0.0
        %1774 = vmatprep.subr.mxu0 0.0
        %1775 = vmatpush2.msra.mxu0 0.0
        %1776 = vmatprep.subr.mxu0 0.0
        %1777 = vmatpush2.msra.mxu0 0.0
        %1778 = vmatprep.subr.mxu0 0.0
        %1779 = vmatpush2.msra.mxu0 0.0
        %1780 = vmatprep.subr.mxu0 0.0
        %1781 = vmatpush2.msra.mxu0 0.0
        %1782 = vmatprep.subr.mxu0 0.0
        %1783 = vmatpush2.msra.mxu0 0.0
        %1784 = vmatprep.mubr.f32.mxu0 0.0
        %v1785 = vand.u32 %v1343, 4294901760
        %1786 = vmatmul.mubr.f32.gmra.mxu0 %v1785
        %v1787 = vpop.f32.mrf.mxu0
        %v1788 = vadd.f32 %v1716, %v1787
        %v1789 = vpop.f32.mrf.mxu0
        %1790 = vdwg.mxu0
        %vm1791 = vcmask 261120
        %v1792 = vsel %vm1791, %v866, 0.0
        %1793 = vadd.xlane.f32.xlu0 %v1792
        %v1794 = vpop.xlane.xlu0 %1793
        %v1795 = vrcp.pop 32.0
        %v1796 = vmul.f32 %v1794, %v1795
        %v1797 = vsub.f32 %v866, %v1796
        %v1798 = vmul.f32 %v1797, %v1797
        %v1799 = vsel %vm1791, %v1798, 0.0
        %1800 = vadd.xlane.f32.xlu0 %v1799
        %v1801 = vpop.xlane.xlu0 %1800
        %v1802 = vmul.f32 %v1801, %v1795
        %v1803 = vadd.f32 %v1802, 1e-12
        %v1804 = vrsqrt.pop %v1803
        %v1805 = vmul.f32 %v1797, %v1804
        %v1807 = vlaneseq
        %v1808 = vshrl.u32 %v1807, 7
        %v1809 = vsub.s32 0, %v1808
        %v1810 = vrot.slane %v379, %v1809
        %v1812 = vmul.f32 %v1810, %v1805
        %v1814 = vlaneseq
        %v1815 = vshrl.u32 %v1814, 7
        %v1816 = vsub.s32 0, %v1815
        %v1817 = vrot.slane %v380, %v1816
        %v1819 = vadd.f32 %v1812, %v1817
        %1820 = vst.msk [vmem:[%s362] sm:$0xff] %vm1791, %v1819
        %v1821 = vadd.f32 %v866, %v1324
        %v1822 = vsel %vm1791, %v1821, 0.0
        %1823 = vadd.xlane.f32.xlu0 %v1822
        %v1824 = vpop.xlane.xlu0 %1823
        %v1825 = vmul.f32 %v1824, %v1795
        %v1826 = vsub.f32 %v1821, %v1825
        %v1827 = vmul.f32 %v1826, %v1826
        %v1828 = vsel %vm1791, %v1827, 0.0
        %1829 = vadd.xlane.f32.xlu0 %v1828
        %v1830 = vpop.xlane.xlu0 %1829
        %v1831 = vmul.f32 %v1830, %v1795
        %v1832 = vadd.f32 %v1831, 1e-12
        %v1833 = vrsqrt.pop %v1832
        %v1834 = vmul.f32 %v1826, %v1833
        %v1835 = vmul.f32 %v1810, %v1834
        %v1836 = vadd.f32 %v1835, %v1817
        %1838 = vrot.lane.b32.xlu0 %v1836, 32
        %v1839 = vpop.permute.xlu0 %1838
        %vm1841 = vcmask 523520
        %1842 = vst.msk [vmem:[%s362] sm:$0xff] %vm1841, %v1839
        %v1844 = vsel %vm877, %v1334, 0
        %1846 = vmatprep.subr.mxu0 0.0
        %1847 = vmatpush1.msra.mxu0 0.0
        %1848 = vmatprep.subr.mxu0 0.0
        %1849 = vmatpush1.msra.mxu0 0.0
        %1850 = vmatprep.subr.mxu0 0.0
        %1851 = vmatpush1.msra.mxu0 0.0
        %1852 = vmatprep.subr.mxu0 0.0
        %1853 = vmatpush1.msra.mxu0 0.0
        %1854 = vmatprep.subr.mxu0 0.0
        %1855 = vmatpush1.msra.mxu0 0.0
        %1856 = vmatprep.subr.mxu0 0.0
        %1857 = vmatpush1.msra.mxu0 0.0
        %1858 = vmatprep.subr.mxu0 0.0
        %1859 = vmatpush1.msra.mxu0 0.0
        %1860 = vmatprep.subr.mxu0 0.0
        %1861 = vmatpush1.msra.mxu0 0.0
        %1862 = vmatprep.subr.mxu0 0.0
        %1863 = vmatpush1.msra.mxu0 0.0
        %1864 = vmatprep.subr.mxu0 0.0
        %1865 = vmatpush1.msra.mxu0 0.0
        %1866 = vmatprep.subr.mxu0 0.0
        %1867 = vmatpush1.msra.mxu0 0.0
        %1868 = vmatprep.subr.mxu0 0.0
        %1869 = vmatpush1.msra.mxu0 0.0
        %1870 = vmatprep.subr.mxu0 0.0
        %1871 = vmatpush1.msra.mxu0 0.0
        %1872 = vmatprep.subr.mxu0 0.0
        %1873 = vmatpush1.msra.mxu0 0.0
        %1874 = vmatprep.subr.mxu0 0.0
        %1875 = vmatpush1.msra.mxu0 0.0
        %1876 = vmatprep.subr.mxu0 0.0
        %v1877 = vand.u32 %v1328, 4294901760
        %1878 = vmatpush1.msra.mxu0 %v1877
        %1879 = vmatprep.subr.mxu0 0.0
        %1880 = vmatpush2.msra.mxu0 0.0
        %1881 = vmatprep.subr.mxu0 0.0
        %1882 = vmatpush2.msra.mxu0 0.0
        %1883 = vmatprep.subr.mxu0 0.0
        %1884 = vmatpush2.msra.mxu0 0.0
        %1885 = vmatprep.subr.mxu0 0.0
        %1886 = vmatpush2.msra.mxu0 0.0
        %1887 = vmatprep.subr.mxu0 0.0
        %1888 = vmatpush2.msra.mxu0 0.0
        %1889 = vmatprep.subr.mxu0 0.0
        %1890 = vmatpush2.msra.mxu0 0.0
        %1891 = vmatprep.subr.mxu0 0.0
        %1892 = vmatpush2.msra.mxu0 0.0
        %1893 = vmatprep.subr.mxu0 0.0
        %1894 = vmatpush2.msra.mxu0 0.0
        %1895 = vmatprep.subr.mxu0 0.0
        %1896 = vmatpush2.msra.mxu0 0.0
        %1897 = vmatprep.subr.mxu0 0.0
        %1898 = vmatpush2.msra.mxu0 0.0
        %1899 = vmatprep.subr.mxu0 0.0
        %1900 = vmatpush2.msra.mxu0 0.0
        %1901 = vmatprep.subr.mxu0 0.0
        %1902 = vmatpush2.msra.mxu0 0.0
        %1903 = vmatprep.subr.mxu0 0.0
        %1904 = vmatpush2.msra.mxu0 0.0
        %1905 = vmatprep.subr.mxu0 0.0
        %1906 = vmatpush2.msra.mxu0 0.0
        %1907 = vmatprep.subr.mxu0 0.0
        %1908 = vmatpush2.msra.mxu0 0.0
        %1909 = vmatprep.subr.mxu0 0.0
        %1910 = vmatpush2.msra.mxu0 0.0
        %1911 = vmatprep.mubr.f32.mxu0 0.0
        %v1912 = vand.u32 %v1844, 4294901760
        %v1913 = vsub.f32 %v1844, %v1912
        %v1914 = vand.u32 %v1913, 4294901760
        %v1915 = vsub.f32 %v1913, %v1914
        %v1916 = vand.u32 %v1915, 4294901760
        %1917 = vmatmul.mubr.f32.gmra.mxu0 %v1916
        %v1918 = vpop.f32.mrf.mxu0
        %v1919 = vadd.f32 %v1788, %v1918
        %v1920 = vpop.f32.mrf.mxu0
        %1921 = vdwg.mxu0
        %1922 = vmatprep.subr.mxu0 0.0
        %1923 = vmatpush1.msra.mxu0 0.0
        %1924 = vmatprep.subr.mxu0 0.0
        %1925 = vmatpush1.msra.mxu0 0.0
        %1926 = vmatprep.subr.mxu0 0.0
        %1927 = vmatpush1.msra.mxu0 0.0
        %1928 = vmatprep.subr.mxu0 0.0
        %1929 = vmatpush1.msra.mxu0 0.0
        %1930 = vmatprep.subr.mxu0 0.0
        %1931 = vmatpush1.msra.mxu0 0.0
        %1932 = vmatprep.subr.mxu0 0.0
        %1933 = vmatpush1.msra.mxu0 0.0
        %1934 = vmatprep.subr.mxu0 0.0
        %1935 = vmatpush1.msra.mxu0 0.0
        %1936 = vmatprep.subr.mxu0 0.0
        %1937 = vmatpush1.msra.mxu0 0.0
        %1938 = vmatprep.subr.mxu0 0.0
        %1939 = vmatpush1.msra.mxu0 0.0
        %1940 = vmatprep.subr.mxu0 0.0
        %1941 = vmatpush1.msra.mxu0 0.0
        %1942 = vmatprep.subr.mxu0 0.0
        %1943 = vmatpush1.msra.mxu0 0.0
        %1944 = vmatprep.subr.mxu0 0.0
        %1945 = vmatpush1.msra.mxu0 0.0
        %1946 = vmatprep.subr.mxu0 0.0
        %1947 = vmatpush1.msra.mxu0 0.0
        %1948 = vmatprep.subr.mxu0 0.0
        %1949 = vmatpush1.msra.mxu0 0.0
        %1950 = vmatprep.subr.mxu0 0.0
        %1951 = vmatpush1.msra.mxu0 0.0
        %1952 = vmatprep.subr.mxu0 0.0
        %v1953 = vand.u32 %v1328, 4294901760
        %v1954 = vsub.f32 %v1328, %v1953
        %v1955 = vand.u32 %v1954, 4294901760
        %v1956 = vsub.f32 %v1954, %v1955
        %v1957 = vand.u32 %v1956, 4294901760
        %1958 = vmatpush1.msra.mxu0 %v1957
        %1959 = vmatprep.subr.mxu0 0.0
        %1960 = vmatpush2.msra.mxu0 0.0
        %1961 = vmatprep.subr.mxu0 0.0
        %1962 = vmatpush2.msra.mxu0 0.0
        %1963 = vmatprep.subr.mxu0 0.0
        %1964 = vmatpush2.msra.mxu0 0.0
        %1965 = vmatprep.subr.mxu0 0.0
        %1966 = vmatpush2.msra.mxu0 0.0
        %1967 = vmatprep.subr.mxu0 0.0
        %1968 = vmatpush2.msra.mxu0 0.0
        %1969 = vmatprep.subr.mxu0 0.0
        %1970 = vmatpush2.msra.mxu0 0.0
        %1971 = vmatprep.subr.mxu0 0.0
        %1972 = vmatpush2.msra.mxu0 0.0
        %1973 = vmatprep.subr.mxu0 0.0
        %1974 = vmatpush2.msra.mxu0 0.0
        %1975 = vmatprep.subr.mxu0 0.0
        %1976 = vmatpush2.msra.mxu0 0.0
        %1977 = vmatprep.subr.mxu0 0.0
        %1978 = vmatpush2.msra.mxu0 0.0
        %1979 = vmatprep.subr.mxu0 0.0
        %1980 = vmatpush2.msra.mxu0 0.0
        %1981 = vmatprep.subr.mxu0 0.0
        %1982 = vmatpush2.msra.mxu0 0.0
        %1983 = vmatprep.subr.mxu0 0.0
        %1984 = vmatpush2.msra.mxu0 0.0
        %1985 = vmatprep.subr.mxu0 0.0
        %1986 = vmatpush2.msra.mxu0 0.0
        %1987 = vmatprep.subr.mxu0 0.0
        %1988 = vmatpush2.msra.mxu0 0.0
        %1989 = vmatprep.subr.mxu0 0.0
        %1990 = vmatpush2.msra.mxu0 0.0
        %1991 = vmatprep.mubr.f32.mxu0 0.0
        %v1992 = vand.u32 %v1844, 4294901760
        %1993 = vmatmul.mubr.f32.gmra.mxu0 %v1992
        %v1994 = vpop.f32.mrf.mxu0
        %v1995 = vadd.f32 %v1919, %v1994
        %v1996 = vpop.f32.mrf.mxu0
        %1997 = vdwg.mxu0
        %1998 = vmatprep.subr.mxu0 0.0
        %1999 = vmatpush1.msra.mxu0 0.0
        %2000 = vmatprep.subr.mxu0 0.0
        %2001 = vmatpush1.msra.mxu0 0.0
        %2002 = vmatprep.subr.mxu0 0.0
        %2003 = vmatpush1.msra.mxu0 0.0
        %2004 = vmatprep.subr.mxu0 0.0
        %2005 = vmatpush1.msra.mxu0 0.0
        %2006 = vmatprep.subr.mxu0 0.0
        %2007 = vmatpush1.msra.mxu0 0.0
        %2008 = vmatprep.subr.mxu0 0.0
        %2009 = vmatpush1.msra.mxu0 0.0
        %2010 = vmatprep.subr.mxu0 0.0
        %2011 = vmatpush1.msra.mxu0 0.0
        %2012 = vmatprep.subr.mxu0 0.0
        %2013 = vmatpush1.msra.mxu0 0.0
        %2014 = vmatprep.subr.mxu0 0.0
        %2015 = vmatpush1.msra.mxu0 0.0
        %2016 = vmatprep.subr.mxu0 0.0
        %2017 = vmatpush1.msra.mxu0 0.0
        %2018 = vmatprep.subr.mxu0 0.0
        %2019 = vmatpush1.msra.mxu0 0.0
        %2020 = vmatprep.subr.mxu0 0.0
        %2021 = vmatpush1.msra.mxu0 0.0
        %2022 = vmatprep.subr.mxu0 0.0
        %2023 = vmatpush1.msra.mxu0 0.0
        %2024 = vmatprep.subr.mxu0 0.0
        %2025 = vmatpush1.msra.mxu0 0.0
        %2026 = vmatprep.subr.mxu0 0.0
        %2027 = vmatpush1.msra.mxu0 0.0
        %2028 = vmatprep.subr.mxu0 0.0
        %v2029 = vand.u32 %v1328, 4294901760
        %v2030 = vsub.f32 %v1328, %v2029
        %2031 = vmatpush1.msra.mxu0 %v2030
        %2032 = vmatprep.subr.mxu0 0.0
        %2033 = vmatpush2.msra.mxu0 0.0
        %2034 = vmatprep.subr.mxu0 0.0
        %2035 = vmatpush2.msra.mxu0 0.0
        %2036 = vmatprep.subr.mxu0 0.0
        %2037 = vmatpush2.msra.mxu0 0.0
        %2038 = vmatprep.subr.mxu0 0.0
        %2039 = vmatpush2.msra.mxu0 0.0
        %2040 = vmatprep.subr.mxu0 0.0
        %2041 = vmatpush2.msra.mxu0 0.0
        %2042 = vmatprep.subr.mxu0 0.0
        %2043 = vmatpush2.msra.mxu0 0.0
        %2044 = vmatprep.subr.mxu0 0.0
        %2045 = vmatpush2.msra.mxu0 0.0
        %2046 = vmatprep.subr.mxu0 0.0
        %2047 = vmatpush2.msra.mxu0 0.0
        %2048 = vmatprep.subr.mxu0 0.0
        %2049 = vmatpush2.msra.mxu0 0.0
        %2050 = vmatprep.subr.mxu0 0.0
        %2051 = vmatpush2.msra.mxu0 0.0
        %2052 = vmatprep.subr.mxu0 0.0
        %2053 = vmatpush2.msra.mxu0 0.0
        %2054 = vmatprep.subr.mxu0 0.0
        %2055 = vmatpush2.msra.mxu0 0.0
        %2056 = vmatprep.subr.mxu0 0.0
        %2057 = vmatpush2.msra.mxu0 0.0
        %2058 = vmatprep.subr.mxu0 0.0
        %2059 = vmatpush2.msra.mxu0 0.0
        %2060 = vmatprep.subr.mxu0 0.0
        %2061 = vmatpush2.msra.mxu0 0.0
        %2062 = vmatprep.subr.mxu0 0.0
        %2063 = vmatpush2.msra.mxu0 0.0
        %2064 = vmatprep.mubr.f32.mxu0 0.0
        %v2065 = vand.u32 %v1844, 4294901760
        %v2066 = vsub.f32 %v1844, %v2065
        %2067 = vmatmul.mubr.f32.gmra.mxu0 %v2066
        %v2068 = vpop.f32.mrf.mxu0
        %v2069 = vadd.f32 %v1995, %v2068
        %v2070 = vpop.f32.mrf.mxu0
        %2071 = vdwg.mxu0
        %2072 = vmatprep.subr.mxu0 0.0
        %2073 = vmatpush1.msra.mxu0 0.0
        %2074 = vmatprep.subr.mxu0 0.0
        %2075 = vmatpush1.msra.mxu0 0.0
        %2076 = vmatprep.subr.mxu0 0.0
        %2077 = vmatpush1.msra.mxu0 0.0
        %2078 = vmatprep.subr.mxu0 0.0
        %2079 = vmatpush1.msra.mxu0 0.0
        %2080 = vmatprep.subr.mxu0 0.0
        %2081 = vmatpush1.msra.mxu0 0.0
        %2082 = vmatprep.subr.mxu0 0.0
        %2083 = vmatpush1.msra.mxu0 0.0
        %2084 = vmatprep.subr.mxu0 0.0
        %2085 = vmatpush1.msra.mxu0 0.0
        %2086 = vmatprep.subr.mxu0 0.0
        %2087 = vmatpush1.msra.mxu0 0.0
        %2088 = vmatprep.subr.mxu0 0.0
        %2089 = vmatpush1.msra.mxu0 0.0
        %2090 = vmatprep.subr.mxu0 0.0
        %2091 = vmatpush1.msra.mxu0 0.0
        %2092 = vmatprep.subr.mxu0 0.0
        %2093 = vmatpush1.msra.mxu0 0.0
        %2094 = vmatprep.subr.mxu0 0.0
        %2095 = vmatpush1.msra.mxu0 0.0
        %2096 = vmatprep.subr.mxu0 0.0
        %2097 = vmatpush1.msra.mxu0 0.0
        %2098 = vmatprep.subr.mxu0 0.0
        %2099 = vmatpush1.msra.mxu0 0.0
        %2100 = vmatprep.subr.mxu0 0.0
        %2101 = vmatpush1.msra.mxu0 0.0
        %2102 = vmatprep.subr.mxu0 0.0
        %v2103 = vand.u32 %v1328, 4294901760
        %2104 = vmatpush1.msra.mxu0 %v2103
        %2105 = vmatprep.subr.mxu0 0.0
        %2106 = vmatpush2.msra.mxu0 0.0
        %2107 = vmatprep.subr.mxu0 0.0
        %2108 = vmatpush2.msra.mxu0 0.0
        %2109 = vmatprep.subr.mxu0 0.0
        %2110 = vmatpush2.msra.mxu0 0.0
        %2111 = vmatprep.subr.mxu0 0.0
        %2112 = vmatpush2.msra.mxu0 0.0
        %2113 = vmatprep.subr.mxu0 0.0
        %2114 = vmatpush2.msra.mxu0 0.0
        %2115 = vmatprep.subr.mxu0 0.0
        %2116 = vmatpush2.msra.mxu0 0.0
        %2117 = vmatprep.subr.mxu0 0.0
        %2118 = vmatpush2.msra.mxu0 0.0
        %2119 = vmatprep.subr.mxu0 0.0
        %2120 = vmatpush2.msra.mxu0 0.0
        %2121 = vmatprep.subr.mxu0 0.0
        %2122 = vmatpush2.msra.mxu0 0.0
        %2123 = vmatprep.subr.mxu0 0.0
        %2124 = vmatpush2.msra.mxu0 0.0
        %2125 = vmatprep.subr.mxu0 0.0
        %2126 = vmatpush2.msra.mxu0 0.0
        %2127 = vmatprep.subr.mxu0 0.0
        %2128 = vmatpush2.msra.mxu0 0.0
        %2129 = vmatprep.subr.mxu0 0.0
        %2130 = vmatpush2.msra.mxu0 0.0
        %2131 = vmatprep.subr.mxu0 0.0
        %2132 = vmatpush2.msra.mxu0 0.0
        %2133 = vmatprep.subr.mxu0 0.0
        %2134 = vmatpush2.msra.mxu0 0.0
        %2135 = vmatprep.subr.mxu0 0.0
        %2136 = vmatpush2.msra.mxu0 0.0
        %2137 = vmatprep.mubr.f32.mxu0 0.0
        %v2138 = vand.u32 %v1844, 4294901760
        %v2139 = vsub.f32 %v1844, %v2138
        %v2140 = vand.u32 %v2139, 4294901760
        %2141 = vmatmul.mubr.f32.gmra.mxu0 %v2140
        %v2142 = vpop.f32.mrf.mxu0
        %v2143 = vadd.f32 %v2069, %v2142
        %v2144 = vpop.f32.mrf.mxu0
        %2145 = vdwg.mxu0
        %2146 = vmatprep.subr.mxu0 0.0
        %2147 = vmatpush1.msra.mxu0 0.0
        %2148 = vmatprep.subr.mxu0 0.0
        %2149 = vmatpush1.msra.mxu0 0.0
        %2150 = vmatprep.subr.mxu0 0.0
        %2151 = vmatpush1.msra.mxu0 0.0
        %2152 = vmatprep.subr.mxu0 0.0
        %2153 = vmatpush1.msra.mxu0 0.0
        %2154 = vmatprep.subr.mxu0 0.0
        %2155 = vmatpush1.msra.mxu0 0.0
        %2156 = vmatprep.subr.mxu0 0.0
        %2157 = vmatpush1.msra.mxu0 0.0
        %2158 = vmatprep.subr.mxu0 0.0
        %2159 = vmatpush1.msra.mxu0 0.0
        %2160 = vmatprep.subr.mxu0 0.0
        %2161 = vmatpush1.msra.mxu0 0.0
        %2162 = vmatprep.subr.mxu0 0.0
        %2163 = vmatpush1.msra.mxu0 0.0
        %2164 = vmatprep.subr.mxu0 0.0
        %2165 = vmatpush1.msra.mxu0 0.0
        %2166 = vmatprep.subr.mxu0 0.0
        %2167 = vmatpush1.msra.mxu0 0.0
        %2168 = vmatprep.subr.mxu0 0.0
        %2169 = vmatpush1.msra.mxu0 0.0
        %2170 = vmatprep.subr.mxu0 0.0
        %2171 = vmatpush1.msra.mxu0 0.0
        %2172 = vmatprep.subr.mxu0 0.0
        %2173 = vmatpush1.msra.mxu0 0.0
        %2174 = vmatprep.subr.mxu0 0.0
        %2175 = vmatpush1.msra.mxu0 0.0
        %2176 = vmatprep.subr.mxu0 0.0
        %v2177 = vand.u32 %v1328, 4294901760
        %v2178 = vsub.f32 %v1328, %v2177
        %v2179 = vand.u32 %v2178, 4294901760
        %2180 = vmatpush1.msra.mxu0 %v2179
        %2181 = vmatprep.subr.mxu0 0.0
        %2182 = vmatpush2.msra.mxu0 0.0
        %2183 = vmatprep.subr.mxu0 0.0
        %2184 = vmatpush2.msra.mxu0 0.0
        %2185 = vmatprep.subr.mxu0 0.0
        %2186 = vmatpush2.msra.mxu0 0.0
        %2187 = vmatprep.subr.mxu0 0.0
        %2188 = vmatpush2.msra.mxu0 0.0
        %2189 = vmatprep.subr.mxu0 0.0
        %2190 = vmatpush2.msra.mxu0 0.0
        %2191 = vmatprep.subr.mxu0 0.0
        %2192 = vmatpush2.msra.mxu0 0.0
        %2193 = vmatprep.subr.mxu0 0.0
        %2194 = vmatpush2.msra.mxu0 0.0
        %2195 = vmatprep.subr.mxu0 0.0
        %2196 = vmatpush2.msra.mxu0 0.0
        %2197 = vmatprep.subr.mxu0 0.0
        %2198 = vmatpush2.msra.mxu0 0.0
        %2199 = vmatprep.subr.mxu0 0.0
        %2200 = vmatpush2.msra.mxu0 0.0
        %2201 = vmatprep.subr.mxu0 0.0
        %2202 = vmatpush2.msra.mxu0 0.0
        %2203 = vmatprep.subr.mxu0 0.0
        %2204 = vmatpush2.msra.mxu0 0.0
        %2205 = vmatprep.subr.mxu0 0.0
        %2206 = vmatpush2.msra.mxu0 0.0
        %2207 = vmatprep.subr.mxu0 0.0
        %2208 = vmatpush2.msra.mxu0 0.0
        %2209 = vmatprep.subr.mxu0 0.0
        %2210 = vmatpush2.msra.mxu0 0.0
        %2211 = vmatprep.subr.mxu0 0.0
        %2212 = vmatpush2.msra.mxu0 0.0
        %2213 = vmatprep.mubr.f32.mxu0 0.0
        %v2214 = vand.u32 %v1844, 4294901760
        %2215 = vmatmul.mubr.f32.gmra.mxu0 %v2214
        %v2216 = vpop.f32.mrf.mxu0
        %v2217 = vadd.f32 %v2143, %v2216
        %v2218 = vpop.f32.mrf.mxu0
        %2219 = vdwg.mxu0
        %2220 = vmatprep.subr.mxu0 0.0
        %2221 = vmatpush1.msra.mxu0 0.0
        %2222 = vmatprep.subr.mxu0 0.0
        %2223 = vmatpush1.msra.mxu0 0.0
        %2224 = vmatprep.subr.mxu0 0.0
        %2225 = vmatpush1.msra.mxu0 0.0
        %2226 = vmatprep.subr.mxu0 0.0
        %2227 = vmatpush1.msra.mxu0 0.0
        %2228 = vmatprep.subr.mxu0 0.0
        %2229 = vmatpush1.msra.mxu0 0.0
        %2230 = vmatprep.subr.mxu0 0.0
        %2231 = vmatpush1.msra.mxu0 0.0
        %2232 = vmatprep.subr.mxu0 0.0
        %2233 = vmatpush1.msra.mxu0 0.0
        %2234 = vmatprep.subr.mxu0 0.0
        %2235 = vmatpush1.msra.mxu0 0.0
        %2236 = vmatprep.subr.mxu0 0.0
        %2237 = vmatpush1.msra.mxu0 0.0
        %2238 = vmatprep.subr.mxu0 0.0
        %2239 = vmatpush1.msra.mxu0 0.0
        %2240 = vmatprep.subr.mxu0 0.0
        %2241 = vmatpush1.msra.mxu0 0.0
        %2242 = vmatprep.subr.mxu0 0.0
        %2243 = vmatpush1.msra.mxu0 0.0
        %2244 = vmatprep.subr.mxu0 0.0
        %2245 = vmatpush1.msra.mxu0 0.0
        %2246 = vmatprep.subr.mxu0 0.0
        %2247 = vmatpush1.msra.mxu0 0.0
        %2248 = vmatprep.subr.mxu0 0.0
        %2249 = vmatpush1.msra.mxu0 0.0
        %2250 = vmatprep.subr.mxu0 0.0
        %v2251 = vand.u32 %v1328, 4294901760
        %2252 = vmatpush1.msra.mxu0 %v2251
        %2253 = vmatprep.subr.mxu0 0.0
        %2254 = vmatpush2.msra.mxu0 0.0
        %2255 = vmatprep.subr.mxu0 0.0
        %2256 = vmatpush2.msra.mxu0 0.0
        %2257 = vmatprep.subr.mxu0 0.0
        %2258 = vmatpush2.msra.mxu0 0.0
        %2259 = vmatprep.subr.mxu0 0.0
        %2260 = vmatpush2.msra.mxu0 0.0
        %2261 = vmatprep.subr.mxu0 0.0
        %2262 = vmatpush2.msra.mxu0 0.0
        %2263 = vmatprep.subr.mxu0 0.0
        %2264 = vmatpush2.msra.mxu0 0.0
        %2265 = vmatprep.subr.mxu0 0.0
        %2266 = vmatpush2.msra.mxu0 0.0
        %2267 = vmatprep.subr.mxu0 0.0
        %2268 = vmatpush2.msra.mxu0 0.0
        %2269 = vmatprep.subr.mxu0 0.0
        %2270 = vmatpush2.msra.mxu0 0.0
        %2271 = vmatprep.subr.mxu0 0.0
        %2272 = vmatpush2.msra.mxu0 0.0
        %2273 = vmatprep.subr.mxu0 0.0
        %2274 = vmatpush2.msra.mxu0 0.0
        %2275 = vmatprep.subr.mxu0 0.0
        %2276 = vmatpush2.msra.mxu0 0.0
        %2277 = vmatprep.subr.mxu0 0.0
        %2278 = vmatpush2.msra.mxu0 0.0
        %2279 = vmatprep.subr.mxu0 0.0
        %2280 = vmatpush2.msra.mxu0 0.0
        %2281 = vmatprep.subr.mxu0 0.0
        %2282 = vmatpush2.msra.mxu0 0.0
        %2283 = vmatprep.subr.mxu0 0.0
        %2284 = vmatpush2.msra.mxu0 0.0
        %2285 = vmatprep.mubr.f32.mxu0 0.0
        %v2286 = vand.u32 %v1844, 4294901760
        %2287 = vmatmul.mubr.f32.gmra.mxu0 %v2286
        %v2288 = vpop.f32.mrf.mxu0
        %v2289 = vadd.f32 %v2217, %v2288
        %v2290 = vpop.f32.mrf.mxu0
        %2291 = vdwg.mxu0
        %v2292 = vadd.f32 %v1821, %v2289
        %v2293 = vsel %vm1791, %v2292, 0.0
        %2294 = vadd.xlane.f32.xlu0 %v2293
        %v2295 = vpop.xlane.xlu0 %2294
        %v2296 = vmul.f32 %v2295, %v1795
        %v2297 = vsub.f32 %v2292, %v2296
        %v2298 = vmul.f32 %v2297, %v2297
        %v2299 = vsel %vm1791, %v2298, 0.0
        %2300 = vadd.xlane.f32.xlu0 %v2299
        %v2301 = vpop.xlane.xlu0 %2300
        %v2302 = vmul.f32 %v2301, %v1795
        %v2303 = vadd.f32 %v2302, 1e-12
        %v2304 = vrsqrt.pop %v2303
        %v2305 = vmul.f32 %v2297, %v2304
        %v2306 = vmul.f32 %v1810, %v2305
        %v2307 = vadd.f32 %v2306, %v1817
        %2309 = vrot.lane.b32.xlu0 %v2307, 64
        %v2310 = vpop.permute.xlu0 %2309
        %vm2312 = vcmask 785920
        %2313 = vst.msk [vmem:[%s362] sm:$0xff] %vm2312, %v2310
        %v2314 = vadd.f32 %v2307, %v2289
        %v2315 = vsel %vm1791, %v2314, 0.0
        %2316 = vadd.xlane.f32.xlu0 %v2315
        %v2317 = vpop.xlane.xlu0 %2316
        %v2318 = vmul.f32 %v2317, %v1795
        %v2319 = vsub.f32 %v2314, %v2318
        %v2320 = vmul.f32 %v2319, %v2319
        %v2321 = vsel %vm1791, %v2320, 0.0
        %2322 = vadd.xlane.f32.xlu0 %v2321
        %v2323 = vpop.xlane.xlu0 %2322
        %v2324 = vmul.f32 %v2323, %v1795
        %v2325 = vadd.f32 %v2324, 1e-12
        %v2326 = vrsqrt.pop %v2325
        %v2327 = vmul.f32 %v2319, %v2326
        %v2328 = vmul.f32 %v1810, %v2327
        %v2329 = vadd.f32 %v2328, %v1817
        %2331 = vrot.lane.b32.xlu0 %v2329, 96
        %v2332 = vpop.permute.xlu0 %2331
        %vm2334 = vcmask 1048320
        %2335 = vst.msk [vmem:[%s362] sm:$0xff] %vm2334, %v2332
        %s2336 = sand.u32 %s240, 1
        %s2337 = scalar_lea.sflag [#allocation3], %s2336
        %s2338 = sand.u32 %s240, 1
        %s2339 = smul.addr %s2338, 8
        %s2340 = scalar_lea.vmem [#allocation2], %s2339
        // Predicated region
        $region57: #{tpu_custom_call.1} parent=55 // pred_check
          %p2341 = pneg %p250
        $region58: #{tpu_custom_call.1} parent=55 // pred_check_branch
          %2343 = sbr.rel (%p2341) target = $region60
        $region59: #{tpu_custom_call.1} parent=55 // pred_region
          %s2345 = ssub.s32 128, 128
          %2346 = vsyncadd %s2337, %s2345
          %s2347 = smul.addr %s23, 128
          %s2348 = scalar_lea.hbm %s9, %s2347
          %s2350 = sshll.u32 %s2340, 4
          %s2351 = int_to_ptr.vmem [resolvable:$true] %s2350
          %2353 = dma.vmem_to_hbm [thread:$0]  %s2351, 128, %s2348, %s2337
        $region60: #{tpu_custom_call.1} parent=55 // pred_fallthru
          _
      $region56: #{tpu_custom_call.1} parent=5 // pred_fallthru
        _
      %p2354 = scmp.le.s32.totalorder 2, %s18
      // Predicated region
      $region61: #{tpu_custom_call.1} parent=5 // pred_check
        %p2355 = pneg %p2354
      $region62: #{tpu_custom_call.1} parent=5 // pred_check_branch
        %2357 = sbr.rel (%p2355) target = $region64
      $region63: #{tpu_custom_call.1} parent=5 // pred_region
        %s2358 = ssub.s32 %s18, 2
        // Predicated region
        $region65: #{tpu_custom_call.1} parent=63 // pred_check
          %p2359 = pneg %p256
        $region66: #{tpu_custom_call.1} parent=63 // pred_check_branch
          %2361 = sbr.rel (%p2359) target = $region68
        $region67: #{tpu_custom_call.1} parent=63 // pred_region
          %s2362 = sand.u32 %s241, 1
          %s2363 = scalar_lea.sflag [#allocation3], %s2362
          %s2364 = sand.u32 %s241, 1
          %s2365 = smul.addr %s2364, 8
          %s2366 = scalar_lea.vmem [#allocation2], %s2365
          %2367 = dma.done %s2363, 128
        $region68: #{tpu_custom_call.1} parent=63 // pred_fallthru
          _
      $region64: #{tpu_custom_call.1} parent=5 // pred_fallthru
        _
    $region6: #{tpu_custom_call.1} parent=1 // loop_footer
      %s22 = sadd.s32 1, %s18
    $region7: #{tpu_custom_call.1} parent=1 // loop_footer_branch
      %17 = sbr.rel target = $region3
    $region8: #{tpu_custom_call.1} parent=1 // loop_exit
      _
    %2368 = vsyncpa [#allocation3], 1
    %s2369 = scalar_lea.sflag [#allocation3], 1
    %2370 = vsyncpa %s2369, 1

</llo_original>
